<compile_context>
chip_gen: v7x
topology: tpu7x:2x2x1
jax: 0.10.0
libtpu: 0.0.40
codegen_flags: <defaults>
</compile_context>

<pallas_src>
import jax
import jax.numpy as jnp
from jax.experimental import pallas as pl
from jax.experimental.pallas import tpu as pltpu


# ----------------------------------------------------------------------------
# Fused Pallas kernel
# ----------------------------------------------------------------------------
def _make_fused_kernel(B, S, H):
    """Single-invocation fused kernel.

    Refs:
      emb_ref  : (S*B, E)   time-major embedded chars
      mask_ref : (S*B, 1)   sequence mask (1 inside length, 0 on padding)
      wproj    : (E, H), bproj: (1, H)               char_proj
      wih      : (H, 8H) = [W_ih_f | W_ih_b],  bih: (1, 8H) combined biases
      whh      : (2H, 8H) block-diag(W_hh_f, W_hh_b)
      wout     : (2H, 128) lane-padded tag head,  bout: (1, 128)
      pred_ref : (S*B, 128) lane-padded emissions (output)
      gx_ref   : (S*B, 8H)  VMEM scratch  — precomputed input gates
      hseq_ref : (S*B, 2H)  VMEM scratch  — [h_fwd | h_bwd] per (t, b)
    """

    def kernel(emb_ref, mask_ref,
               wproj_ref, bproj_ref,
               wih_ref, bih_ref, whh_ref,
               wout_ref, bout_ref,
               pred_ref,
               gx_ref, hseq_ref):
        # ---- Stage A: char_proj + masked_fill + input gate projection (batched) ----
        proj = (jnp.dot(emb_ref[...], wproj_ref[...],
                        preferred_element_type=jnp.float32)
                + bproj_ref[...]) * mask_ref[...]                        # (S*B, H)
        gx_ref[...] = (jnp.dot(proj, wih_ref[...],
                               preferred_element_type=jnp.float32)
                       + bih_ref[...])                                   # (S*B, 8H)

        # ---- Stage B: sequential recurrence (fully unrolled, static indices) -------
        h_cat = jnp.zeros((B, 2 * H), jnp.float32)   # [h_fwd | h_bwd]
        c_f = jnp.zeros((B, H), jnp.float32)
        c_b = jnp.zeros((B, H), jnp.float32)

        def lstm_gates(g, c):
            # PyTorch gate order i, f, g, o
            i_g = jax.nn.sigmoid(g[:, 0:H])
            f_g = jax.nn.sigmoid(g[:, H:2 * H])
            g_g = jnp.tanh(g[:, 2 * H:3 * H])
            o_g = jax.nn.sigmoid(g[:, 3 * H:4 * H])
            c_new = f_g * c + i_g * g_g
            h_new = o_g * jnp.tanh(c_new)
            return h_new, c_new

        for s in range(S):                       # static unroll over time
            t_b = S - 1 - s                      # backward direction time index
            # one fused (B, 2H) @ (2H, 8H) matmul for both directions
            g_hh = jnp.dot(h_cat, whh_ref[...],
                           preferred_element_type=jnp.float32)           # (B, 8H)
            g_f = gx_ref[s * B:(s + 1) * B, 0:4 * H] + g_hh[:, 0:4 * H]
            g_b = gx_ref[t_b * B:(t_b + 1) * B, 4 * H:8 * H] + g_hh[:, 4 * H:8 * H]
            h_f, c_f = lstm_gates(g_f, c_f)
            h_b, c_b = lstm_gates(g_b, c_b)
            hseq_ref[s * B:(s + 1) * B, 0:H] = h_f          # fwd hidden at time s
            hseq_ref[t_b * B:(t_b + 1) * B, H:2 * H] = h_b  # bwd hidden at time S-1-s
            h_cat = jnp.concatenate([h_f, h_b], axis=-1)

        # ---- Stage C: tag head, lane-dense (128-wide) output -----------------------
        pred_ref[...] = (jnp.dot(hseq_ref[...], wout_ref[...],
                                 preferred_element_type=jnp.float32)
                         + bout_ref[...])

    return kernel


# ----------------------------------------------------------------------------
# Wrapper
# ----------------------------------------------------------------------------
def bilstm_forward(params, char, char_len, B, S):
    """Full forward: embedding -> char_proj + mask -> BiLSTM -> tag head."""
    E = params["emb_table"].shape[1]
    H = params["w_proj"].shape[1]
    T = params["w_out"].shape[1]
    TP = 128  # lane-padded tag width

    # _genmask: mask[b, 0:len[b]] = 1  (built time-major to match kernel layout)
    mask_bs = (jax.lax.broadcasted_iota(jnp.int32, (B, S), 1)
               < char_len[:, None]).astype(jnp.float32)                  # (B, S)
    mask_t = mask_bs.T.reshape(S * B, 1)                                 # (S*B, 1)

    # embedding lookup gathered directly in time-major layout (no activation transpose)
    emb_t = params["emb_table"][char.T].reshape(S * B, E)                # (S*B, E)

    # drop_emb: identity in eval mode (is_train=False)

    # one-time weight repacking (done in plain JAX outside the kernel)
    wih = jnp.concatenate([params["wih_f"], params["wih_b"]], axis=1)    # (H, 8H)
    bih = jnp.concatenate([params["bias_f"], params["bias_b"]], axis=1)  # (1, 8H)
    z = jnp.zeros((H, 4 * H), jnp.float32)
    whh = jnp.concatenate(
        [jnp.concatenate([params["whh_f"], z], axis=1),
         jnp.concatenate([z, params["whh_b"]], axis=1)], axis=0)         # (2H, 8H)
    wout = jnp.pad(params["w_out"], ((0, 0), (0, TP - T)))               # (2H, 128)
    bout = jnp.pad(params["b_out"], ((0, 0), (0, TP - T)))               # (1, 128)

    kernel = _make_fused_kernel(B, S, H)
    pred_pad = pl.pallas_call(
        kernel,
        out_shape=jax.ShapeDtypeStruct((S * B, TP), jnp.float32),
        scratch_shapes=[
            pltpu.VMEM((S * B, 8 * H), jnp.float32),   # gx   (input gates)
            pltpu.VMEM((S * B, 2 * H), jnp.float32),   # hseq ([fwd | bwd] hidden)
        ],
    )(emb_t, mask_t,
      params["w_proj"], params["b_proj"],
      wih, bih, whh, wout, bout)

    # (S*B, 128) time-major, lane-padded -> (B, S, T) emissions
    return pred_pad.reshape(S, B, TP).transpose(1, 0, 2)[:, :, :T]


# ----------------------------------------------------------------------------
# Pure-JAX reference (for correctness check)
# ----------------------------------------------------------------------------
def _lstm_dir_ref(x_seq, wih, whh, b, reverse):
    S, B, H = x_seq.shape[0], x_seq.shape[1], whh.shape[0]
    h = jnp.zeros((B, H), jnp.float32)
    c = jnp.zeros((B, H), jnp.float32)
    out = jnp.zeros((S, B, H), jnp.float32)
    order = range(S - 1, -1, -1) if reverse else range(S)
    for t in order:
        gates = x_seq[t] @ wih + h @ whh + b[0]
        i_g = jax.nn.sigmoid(gates[:, 0:H])
        f_g = jax.nn.sigmoid(gates[:, H:2 * H])
        g_g = jnp.tanh(gates[:, 2 * H:3 * H])
        o_g = jax.nn.sigmoid(gates[:, 3 * H:4 * H])
        c = f_g * c + i_g * g_g
        h = o_g * jnp.tanh(c)
        out = out.at[t].set(h)
    return out


def bilstm_forward_ref(params, char, char_len, B, S):
    E = params["emb_table"].shape[1]
    H = params["w_proj"].shape[1]
    mask = (jax.lax.broadcasted_iota(jnp.int32, (B, S), 1)
            < char_len[:, None]).astype(jnp.float32)
    emb = params["emb_table"][char]
    proj = (emb.reshape(B * S, E) @ params["w_proj"] + params["b_proj"]) \
        * mask.reshape(B * S, 1)
    x_tbh = proj.reshape(B, S, H).transpose(1, 0, 2)
    out_f = _lstm_dir_ref(x_tbh, params["wih_f"], params["whh_f"],
                          params["bias_f"], reverse=False)
    out_b = _lstm_dir_ref(x_tbh, params["wih_b"], params["whh_b"],
                          params["bias_b"], reverse=True)
    h = jnp.concatenate([out_f, out_b], axis=-1)
    h_bt = h.transpose(1, 0, 2).reshape(B * S, 2 * H)
    pred = h_bt @ params["w_out"] + params["b_out"]
    return pred.reshape(B, S, -1)


# ----------------------------------------------------------------------------
# Main
# ----------------------------------------------------------------------------
if __name__ == "__main__":
    # conf: emb_size=32, hidden_size=32, num_tags=4, vocab=50; batch=2, seq=8
    B, S, E, H, T, V = 2, 8, 32, 32, 4, 50

    key = jax.random.PRNGKey(0)
    ks = jax.random.split(key, 12)

    params = {
        "emb_table": 0.1 * jax.random.normal(ks[0], (V, E), jnp.float32),
        "w_proj":    0.1 * jax.random.normal(ks[1], (E, H), jnp.float32),
        "b_proj":    0.1 * jax.random.normal(ks[2], (1, H), jnp.float32),
        # LSTM weights stored transposed: (H, 4H); combined bias b_ih + b_hh: (1, 4H)
        "wih_f":     0.1 * jax.random.normal(ks[3], (H, 4 * H), jnp.float32),
        "whh_f":     0.1 * jax.random.normal(ks[4], (H, 4 * H), jnp.float32),
        "bias_f":    0.1 * jax.random.normal(ks[5], (1, 4 * H), jnp.float32),
        "wih_b":     0.1 * jax.random.normal(ks[6], (H, 4 * H), jnp.float32),
        "whh_b":     0.1 * jax.random.normal(ks[7], (H, 4 * H), jnp.float32),
        "bias_b":    0.1 * jax.random.normal(ks[8], (1, 4 * H), jnp.float32),
        "w_out":     0.1 * jax.random.normal(ks[9], (2 * H, T), jnp.float32),
        "b_out":     0.1 * jax.random.normal(ks[10], (1, T), jnp.float32),
    }

    char = jax.random.randint(ks[11], (B, S), 0, V, dtype=jnp.int32)
    char_len = jnp.array([S, 5], dtype=jnp.int32)

    pred = jax.block_until_ready(bilstm_forward(params, char, char_len, B, S))

    pred_ref = bilstm_forward_ref(params, char, char_len, B, S)
    assert pred.shape == (B, S, T)
    assert jnp.allclose(pred, pred_ref, atol=1e-3, rtol=1e-3)

    print("KERNEL_OK")
</pallas_src>

<mosaic_0001>
module attributes {stable_mosaic.version = 11 : i64} {
  func.func @kernel(%arg0: memref<16x32xf32, #tpu.memory_space<vmem>>, %arg1: memref<16x1xf32, #tpu.memory_space<vmem>>, %arg2: memref<32x32xf32, #tpu.memory_space<vmem>>, %arg3: memref<1x32xf32, #tpu.memory_space<vmem>>, %arg4: memref<32x256xf32, #tpu.memory_space<vmem>>, %arg5: memref<1x256xf32, #tpu.memory_space<vmem>>, %arg6: memref<64x256xf32, #tpu.memory_space<vmem>>, %arg7: memref<64x128xf32, #tpu.memory_space<vmem>>, %arg8: memref<1x128xf32, #tpu.memory_space<vmem>>, %arg9: memref<16x128xf32, #tpu.memory_space<vmem>>, %arg10: memref<16x256xf32, #tpu.memory_space<vmem>>, %arg11: memref<16x64xf32, #tpu.memory_space<vmem>>) attributes {dimension_semantics = [], scalar_prefetch = 0 : i64, scratch_operands = 2 : i64, tpu.core_type = #tpu.core_type<tc>} {
    %c0 = arith.constant 0 : index
    %c0_0 = arith.constant 0 : index
    %0 = vector.load %arg0[%c0, %c0_0] : memref<16x32xf32, #tpu.memory_space<vmem>>, vector<16x32xf32>
    %c0_1 = arith.constant 0 : index
    %c0_2 = arith.constant 0 : index
    %1 = vector.load %arg2[%c0_1, %c0_2] : memref<32x32xf32, #tpu.memory_space<vmem>>, vector<32x32xf32>
    %cst = arith.constant dense<0.000000e+00> : vector<16x32xf32>
    %2 = tpu.matmul %0, %1, %cst {dimension_numbers = #tpu.dot_dimension_numbers<[1], [0], [0], [1], [0, 0, 1, 1], [], []>} : vector<16x32xf32>, vector<32x32xf32>, vector<16x32xf32> -> vector<16x32xf32>
    %c0_3 = arith.constant 0 : index
    %c0_4 = arith.constant 0 : index
    %3 = vector.load %arg3[%c0_3, %c0_4] : memref<1x32xf32, #tpu.memory_space<vmem>>, vector<1x32xf32>
    %4 = vector.broadcast %3 : vector<1x32xf32> to vector<16x32xf32>
    %5 = arith.addf %2, %4 : vector<16x32xf32>
    %c0_5 = arith.constant 0 : index
    %c0_6 = arith.constant 0 : index
    %6 = vector.load %arg1[%c0_5, %c0_6] : memref<16x1xf32, #tpu.memory_space<vmem>>, vector<16x1xf32>
    %7 = vector.broadcast %6 : vector<16x1xf32> to vector<16x32xf32>
    %8 = arith.mulf %5, %7 : vector<16x32xf32>
    %c0_7 = arith.constant 0 : index
    %c0_8 = arith.constant 0 : index
    %9 = vector.load %arg4[%c0_7, %c0_8] : memref<32x256xf32, #tpu.memory_space<vmem>>, vector<32x256xf32>
    %cst_9 = arith.constant dense<0.000000e+00> : vector<16x256xf32>
    %10 = tpu.matmul %8, %9, %cst_9 {dimension_numbers = #tpu.dot_dimension_numbers<[1], [0], [0], [1], [0, 0, 1, 1], [], []>} : vector<16x32xf32>, vector<32x256xf32>, vector<16x256xf32> -> vector<16x256xf32>
    %c0_10 = arith.constant 0 : index
    %c0_11 = arith.constant 0 : index
    %11 = vector.load %arg5[%c0_10, %c0_11] : memref<1x256xf32, #tpu.memory_space<vmem>>, vector<1x256xf32>
    %12 = vector.broadcast %11 : vector<1x256xf32> to vector<16x256xf32>
    %13 = arith.addf %10, %12 : vector<16x256xf32>
    %c0_12 = arith.constant 0 : index
    %c0_13 = arith.constant 0 : index
    %14 = vector.load %arg10[%c0_12, %c0_13] : memref<16x256xf32, #tpu.memory_space<vmem>>, vector<16x256xf32>
    tpu.vector_store %arg10[%c0_12, %c0_13], %13 {strides = array<i32>} : memref<16x256xf32, #tpu.memory_space<vmem>>, vector<16x256xf32>,
    %cst_14 = arith.constant 0.000000e+00 : f32
    %15 = vector.broadcast %cst_14 : f32 to vector<2x64xf32>
    %cst_15 = arith.constant 0.000000e+00 : f32
    %16 = vector.broadcast %cst_15 : f32 to vector<2x32xf32>
    %cst_16 = arith.constant 0.000000e+00 : f32
    %17 = vector.broadcast %cst_16 : f32 to vector<2x32xf32>
    %c0_17 = arith.constant 0 : index
    %c0_18 = arith.constant 0 : index
    %18 = vector.load %arg6[%c0_17, %c0_18] : memref<64x256xf32, #tpu.memory_space<vmem>>, vector<64x256xf32>
    %cst_19 = arith.constant dense<0.000000e+00> : vector<2x256xf32>
    %19 = tpu.matmul %15, %18, %cst_19 {dimension_numbers = #tpu.dot_dimension_numbers<[1], [0], [0], [1], [0, 0, 1, 1], [], []>} : vector<2x64xf32>, vector<64x256xf32>, vector<2x256xf32> -> vector<2x256xf32>
    %c0_20 = arith.constant 0 : index
    %c0_21 = arith.constant 0 : index
    %20 = vector.load %arg10[%c0_20, %c0_21] : memref<16x256xf32, #tpu.memory_space<vmem>>, vector<2x128xf32>
    %21 = vector.extract_strided_slice %19 {offsets = [0, 0], sizes = [2, 128], strides = [1, 1]} : vector<2x256xf32> to vector<2x128xf32>
    %22 = arith.addf %20, %21 : vector<2x128xf32>
    %c14 = arith.constant 14 : index
    %c128 = arith.constant 128 : index
    %23 = vector.load %arg10[%c14, %c128] : memref<16x256xf32, #tpu.memory_space<vmem>>, vector<2x128xf32>
    %24 = vector.extract_strided_slice %19 {offsets = [0, 128], sizes = [2, 128], strides = [1, 1]} : vector<2x256xf32> to vector<2x128xf32>
    %25 = arith.addf %23, %24 : vector<2x128xf32>
    %26 = vector.extract_strided_slice %22 {offsets = [0, 0], sizes = [2, 32], strides = [1, 1]} : vector<2x128xf32> to vector<2x32xf32>
    %27 = arith.negf %26 : vector<2x32xf32>
    %28 = math.exp %27 : vector<2x32xf32>
    %cst_22 = arith.constant 1.000000e+00 : f32
    %29 = vector.broadcast %cst_22 : f32 to vector<2x32xf32>
    %30 = arith.addf %29, %28 : vector<2x32xf32>
    %31 = arith.divf %29, %30 : vector<2x32xf32>
    %32 = vector.extract_strided_slice %22 {offsets = [0, 32], sizes = [2, 32], strides = [1, 1]} : vector<2x128xf32> to vector<2x32xf32>
    %33 = arith.negf %32 : vector<2x32xf32>
    %34 = math.exp %33 : vector<2x32xf32>
    %cst_23 = arith.constant 1.000000e+00 : f32
    %35 = vector.broadcast %cst_23 : f32 to vector<2x32xf32>
    %36 = arith.addf %35, %34 : vector<2x32xf32>
    %37 = arith.divf %35, %36 : vector<2x32xf32>
    %38 = vector.extract_strided_slice %22 {offsets = [0, 64], sizes = [2, 32], strides = [1, 1]} : vector<2x128xf32> to vector<2x32xf32>
    %39 = math.tanh %38 : vector<2x32xf32>
    %40 = vector.extract_strided_slice %22 {offsets = [0, 96], sizes = [2, 32], strides = [1, 1]} : vector<2x128xf32> to vector<2x32xf32>
    %41 = arith.negf %40 : vector<2x32xf32>
    %42 = math.exp %41 : vector<2x32xf32>
    %cst_24 = arith.constant 1.000000e+00 : f32
    %43 = vector.broadcast %cst_24 : f32 to vector<2x32xf32>
    %44 = arith.addf %43, %42 : vector<2x32xf32>
    %45 = arith.divf %43, %44 : vector<2x32xf32>
    %46 = arith.mulf %37, %16 : vector<2x32xf32>
    %47 = arith.mulf %31, %39 : vector<2x32xf32>
    %48 = arith.addf %46, %47 : vector<2x32xf32>
    %49 = math.tanh %48 : vector<2x32xf32>
    %50 = arith.mulf %45, %49 : vector<2x32xf32>
    %51 = vector.extract_strided_slice %25 {offsets = [0, 0], sizes = [2, 32], strides = [1, 1]} : vector<2x128xf32> to vector<2x32xf32>
    %52 = arith.negf %51 : vector<2x32xf32>
    %53 = math.exp %52 : vector<2x32xf32>
    %cst_25 = arith.constant 1.000000e+00 : f32
    %54 = vector.broadcast %cst_25 : f32 to vector<2x32xf32>
    %55 = arith.addf %54, %53 : vector<2x32xf32>
    %56 = arith.divf %54, %55 : vector<2x32xf32>
    %57 = vector.extract_strided_slice %25 {offsets = [0, 32], sizes = [2, 32], strides = [1, 1]} : vector<2x128xf32> to vector<2x32xf32>
    %58 = arith.negf %57 : vector<2x32xf32>
    %59 = math.exp %58 : vector<2x32xf32>
    %cst_26 = arith.constant 1.000000e+00 : f32
    %60 = vector.broadcast %cst_26 : f32 to vector<2x32xf32>
    %61 = arith.addf %60, %59 : vector<2x32xf32>
    %62 = arith.divf %60, %61 : vector<2x32xf32>
    %63 = vector.extract_strided_slice %25 {offsets = [0, 64], sizes = [2, 32], strides = [1, 1]} : vector<2x128xf32> to vector<2x32xf32>
    %64 = math.tanh %63 : vector<2x32xf32>
    %65 = vector.extract_strided_slice %25 {offsets = [0, 96], sizes = [2, 32], strides = [1, 1]} : vector<2x128xf32> to vector<2x32xf32>
    %66 = arith.negf %65 : vector<2x32xf32>
    %67 = math.exp %66 : vector<2x32xf32>
    %cst_27 = arith.constant 1.000000e+00 : f32
    %68 = vector.broadcast %cst_27 : f32 to vector<2x32xf32>
    %69 = arith.addf %68, %67 : vector<2x32xf32>
    %70 = arith.divf %68, %69 : vector<2x32xf32>
    %71 = arith.mulf %62, %17 : vector<2x32xf32>
    %72 = arith.mulf %56, %64 : vector<2x32xf32>
    %73 = arith.addf %71, %72 : vector<2x32xf32>
    %74 = math.tanh %73 : vector<2x32xf32>
    %75 = arith.mulf %70, %74 : vector<2x32xf32>
    %c0_28 = arith.constant 0 : index
    %c0_29 = arith.constant 0 : index
    %76 = vector.load %arg11[%c0_28, %c0_29] : memref<16x64xf32, #tpu.memory_space<vmem>>, vector<2x32xf32>
    tpu.vector_store %arg11[%c0_28, %c0_29], %50 {strides = array<i32>} : memref<16x64xf32, #tpu.memory_space<vmem>>, vector<2x32xf32>,
    %c14_30 = arith.constant 14 : index
    %c32 = arith.constant 32 : index
    %77 = vector.load %arg11[%c14_30, %c32] : memref<16x64xf32, #tpu.memory_space<vmem>>, vector<2x32xf32>
    tpu.vector_store %arg11[%c14_30, %c32], %75 {strides = array<i32>} : memref<16x64xf32, #tpu.memory_space<vmem>>, vector<2x32xf32>,
    %78 = tpu.concatenate %50, %75 in 1 : vector<2x32xf32>, vector<2x32xf32> -> vector<2x64xf32>
    %c0_31 = arith.constant 0 : index
    %c0_32 = arith.constant 0 : index
    %79 = vector.load %arg6[%c0_31, %c0_32] : memref<64x256xf32, #tpu.memory_space<vmem>>, vector<64x256xf32>
    %cst_33 = arith.constant dense<0.000000e+00> : vector<2x256xf32>
    %80 = tpu.matmul %78, %79, %cst_33 {dimension_numbers = #tpu.dot_dimension_numbers<[1], [0], [0], [1], [0, 0, 1, 1], [], []>} : vector<2x64xf32>, vector<64x256xf32>, vector<2x256xf32> -> vector<2x256xf32>
    %c2 = arith.constant 2 : index
    %c0_34 = arith.constant 0 : index
    %81 = vector.load %arg10[%c2, %c0_34] : memref<16x256xf32, #tpu.memory_space<vmem>>, vector<2x128xf32>
    %82 = vector.extract_strided_slice %80 {offsets = [0, 0], sizes = [2, 128], strides = [1, 1]} : vector<2x256xf32> to vector<2x128xf32>
    %83 = arith.addf %81, %82 : vector<2x128xf32>
    %c12 = arith.constant 12 : index
    %c128_35 = arith.constant 128 : index
    %84 = vector.load %arg10[%c12, %c128_35] : memref<16x256xf32, #tpu.memory_space<vmem>>, vector<2x128xf32>
    %85 = vector.extract_strided_slice %80 {offsets = [0, 128], sizes = [2, 128], strides = [1, 1]} : vector<2x256xf32> to vector<2x128xf32>
    %86 = arith.addf %84, %85 : vector<2x128xf32>
    %87 = vector.extract_strided_slice %83 {offsets = [0, 0], sizes = [2, 32], strides = [1, 1]} : vector<2x128xf32> to vector<2x32xf32>
    %88 = arith.negf %87 : vector<2x32xf32>
    %89 = math.exp %88 : vector<2x32xf32>
    %cst_36 = arith.constant 1.000000e+00 : f32
    %90 = vector.broadcast %cst_36 : f32 to vector<2x32xf32>
    %91 = arith.addf %90, %89 : vector<2x32xf32>
    %92 = arith.divf %90, %91 : vector<2x32xf32>
    %93 = vector.extract_strided_slice %83 {offsets = [0, 32], sizes = [2, 32], strides = [1, 1]} : vector<2x128xf32> to vector<2x32xf32>
    %94 = arith.negf %93 : vector<2x32xf32>
    %95 = math.exp %94 : vector<2x32xf32>
    %cst_37 = arith.constant 1.000000e+00 : f32
    %96 = vector.broadcast %cst_37 : f32 to vector<2x32xf32>
    %97 = arith.addf %96, %95 : vector<2x32xf32>
    %98 = arith.divf %96, %97 : vector<2x32xf32>
    %99 = vector.extract_strided_slice %83 {offsets = [0, 64], sizes = [2, 32], strides = [1, 1]} : vector<2x128xf32> to vector<2x32xf32>
    %100 = math.tanh %99 : vector<2x32xf32>
    %101 = vector.extract_strided_slice %83 {offsets = [0, 96], sizes = [2, 32], strides = [1, 1]} : vector<2x128xf32> to vector<2x32xf32>
    %102 = arith.negf %101 : vector<2x32xf32>
    %103 = math.exp %102 : vector<2x32xf32>
    %cst_38 = arith.constant 1.000000e+00 : f32
    %104 = vector.broadcast %cst_38 : f32 to vector<2x32xf32>
    %105 = arith.addf %104, %103 : vector<2x32xf32>
    %106 = arith.divf %104, %105 : vector<2x32xf32>
    %107 = arith.mulf %98, %48 : vector<2x32xf32>
    %108 = arith.mulf %92, %100 : vector<2x32xf32>
    %109 = arith.addf %107, %108 : vector<2x32xf32>
    %110 = math.tanh %109 : vector<2x32xf32>
    %111 = arith.mulf %106, %110 : vector<2x32xf32>
    %112 = vector.extract_strided_slice %86 {offsets = [0, 0], sizes = [2, 32], strides = [1, 1]} : vector<2x128xf32> to vector<2x32xf32>
    %113 = arith.negf %112 : vector<2x32xf32>
    %114 = math.exp %113 : vector<2x32xf32>
    %cst_39 = arith.constant 1.000000e+00 : f32
    %115 = vector.broadcast %cst_39 : f32 to vector<2x32xf32>
    %116 = arith.addf %115, %114 : vector<2x32xf32>
    %117 = arith.divf %115, %116 : vector<2x32xf32>
    %118 = vector.extract_strided_slice %86 {offsets = [0, 32], sizes = [2, 32], strides = [1, 1]} : vector<2x128xf32> to vector<2x32xf32>
    %119 = arith.negf %118 : vector<2x32xf32>
    %120 = math.exp %119 : vector<2x32xf32>
    %cst_40 = arith.constant 1.000000e+00 : f32
    %121 = vector.broadcast %cst_40 : f32 to vector<2x32xf32>
    %122 = arith.addf %121, %120 : vector<2x32xf32>
    %123 = arith.divf %121, %122 : vector<2x32xf32>
    %124 = vector.extract_strided_slice %86 {offsets = [0, 64], sizes = [2, 32], strides = [1, 1]} : vector<2x128xf32> to vector<2x32xf32>
    %125 = math.tanh %124 : vector<2x32xf32>
    %126 = vector.extract_strided_slice %86 {offsets = [0, 96], sizes = [2, 32], strides = [1, 1]} : vector<2x128xf32> to vector<2x32xf32>
    %127 = arith.negf %126 : vector<2x32xf32>
    %128 = math.exp %127 : vector<2x32xf32>
    %cst_41 = arith.constant 1.000000e+00 : f32
    %129 = vector.broadcast %cst_41 : f32 to vector<2x32xf32>
    %130 = arith.addf %129, %128 : vector<2x32xf32>
    %131 = arith.divf %129, %130 : vector<2x32xf32>
    %132 = arith.mulf %123, %73 : vector<2x32xf32>
    %133 = arith.mulf %117, %125 : vector<2x32xf32>
    %134 = arith.addf %132, %133 : vector<2x32xf32>
    %135 = math.tanh %134 : vector<2x32xf32>
    %136 = arith.mulf %131, %135 : vector<2x32xf32>
    %c2_42 = arith.constant 2 : index
    %c0_43 = arith.constant 0 : index
    %137 = vector.load %arg11[%c2_42, %c0_43] : memref<16x64xf32, #tpu.memory_space<vmem>>, vector<2x32xf32>
    tpu.vector_store %arg11[%c2_42, %c0_43], %111 {strides = array<i32>} : memref<16x64xf32, #tpu.memory_space<vmem>>, vector<2x32xf32>,
    %c12_44 = arith.constant 12 : index
    %c32_45 = arith.constant 32 : index
    %138 = vector.load %arg11[%c12_44, %c32_45] : memref<16x64xf32, #tpu.memory_space<vmem>>, vector<2x32xf32>
    tpu.vector_store %arg11[%c12_44, %c32_45], %136 {strides = array<i32>} : memref<16x64xf32, #tpu.memory_space<vmem>>, vector<2x32xf32>,
    %139 = tpu.concatenate %111, %136 in 1 : vector<2x32xf32>, vector<2x32xf32> -> vector<2x64xf32>
    %c0_46 = arith.constant 0 : index
    %c0_47 = arith.constant 0 : index
    %140 = vector.load %arg6[%c0_46, %c0_47] : memref<64x256xf32, #tpu.memory_space<vmem>>, vector<64x256xf32>
    %cst_48 = arith.constant dense<0.000000e+00> : vector<2x256xf32>
    %141 = tpu.matmul %139, %140, %cst_48 {dimension_numbers = #tpu.dot_dimension_numbers<[1], [0], [0], [1], [0, 0, 1, 1], [], []>} : vector<2x64xf32>, vector<64x256xf32>, vector<2x256xf32> -> vector<2x256xf32>
    %c4 = arith.constant 4 : index
    %c0_49 = arith.constant 0 : index
    %142 = vector.load %arg10[%c4, %c0_49] : memref<16x256xf32, #tpu.memory_space<vmem>>, vector<2x128xf32>
    %143 = vector.extract_strided_slice %141 {offsets = [0, 0], sizes = [2, 128], strides = [1, 1]} : vector<2x256xf32> to vector<2x128xf32>
    %144 = arith.addf %142, %143 : vector<2x128xf32>
    %c10 = arith.constant 10 : index
    %c128_50 = arith.constant 128 : index
    %145 = vector.load %arg10[%c10, %c128_50] : memref<16x256xf32, #tpu.memory_space<vmem>>, vector<2x128xf32>
    %146 = vector.extract_strided_slice %141 {offsets = [0, 128], sizes = [2, 128], strides = [1, 1]} : vector<2x256xf32> to vector<2x128xf32>
    %147 = arith.addf %145, %146 : vector<2x128xf32>
    %148 = vector.extract_strided_slice %144 {offsets = [0, 0], sizes = [2, 32], strides = [1, 1]} : vector<2x128xf32> to vector<2x32xf32>
    %149 = arith.negf %148 : vector<2x32xf32>
    %150 = math.exp %149 : vector<2x32xf32>
    %cst_51 = arith.constant 1.000000e+00 : f32
    %151 = vector.broadcast %cst_51 : f32 to vector<2x32xf32>
    %152 = arith.addf %151, %150 : vector<2x32xf32>
    %153 = arith.divf %151, %152 : vector<2x32xf32>
    %154 = vector.extract_strided_slice %144 {offsets = [0, 32], sizes = [2, 32], strides = [1, 1]} : vector<2x128xf32> to vector<2x32xf32>
    %155 = arith.negf %154 : vector<2x32xf32>
    %156 = math.exp %155 : vector<2x32xf32>
    %cst_52 = arith.constant 1.000000e+00 : f32
    %157 = vector.broadcast %cst_52 : f32 to vector<2x32xf32>
    %158 = arith.addf %157, %156 : vector<2x32xf32>
    %159 = arith.divf %157, %158 : vector<2x32xf32>
    %160 = vector.extract_strided_slice %144 {offsets = [0, 64], sizes = [2, 32], strides = [1, 1]} : vector<2x128xf32> to vector<2x32xf32>
    %161 = math.tanh %160 : vector<2x32xf32>
    %162 = vector.extract_strided_slice %144 {offsets = [0, 96], sizes = [2, 32], strides = [1, 1]} : vector<2x128xf32> to vector<2x32xf32>
    %163 = arith.negf %162 : vector<2x32xf32>
    %164 = math.exp %163 : vector<2x32xf32>
    %cst_53 = arith.constant 1.000000e+00 : f32
    %165 = vector.broadcast %cst_53 : f32 to vector<2x32xf32>
    %166 = arith.addf %165, %164 : vector<2x32xf32>
    %167 = arith.divf %165, %166 : vector<2x32xf32>
    %168 = arith.mulf %159, %109 : vector<2x32xf32>
    %169 = arith.mulf %153, %161 : vector<2x32xf32>
    %170 = arith.addf %168, %169 : vector<2x32xf32>
    %171 = math.tanh %170 : vector<2x32xf32>
    %172 = arith.mulf %167, %171 : vector<2x32xf32>
    %173 = vector.extract_strided_slice %147 {offsets = [0, 0], sizes = [2, 32], strides = [1, 1]} : vector<2x128xf32> to vector<2x32xf32>
    %174 = arith.negf %173 : vector<2x32xf32>
    %175 = math.exp %174 : vector<2x32xf32>
    %cst_54 = arith.constant 1.000000e+00 : f32
    %176 = vector.broadcast %cst_54 : f32 to vector<2x32xf32>
    %177 = arith.addf %176, %175 : vector<2x32xf32>
    %178 = arith.divf %176, %177 : vector<2x32xf32>
    %179 = vector.extract_strided_slice %147 {offsets = [0, 32], sizes = [2, 32], strides = [1, 1]} : vector<2x128xf32> to vector<2x32xf32>
    %180 = arith.negf %179 : vector<2x32xf32>
    %181 = math.exp %180 : vector<2x32xf32>
    %cst_55 = arith.constant 1.000000e+00 : f32
    %182 = vector.broadcast %cst_55 : f32 to vector<2x32xf32>
    %183 = arith.addf %182, %181 : vector<2x32xf32>
    %184 = arith.divf %182, %183 : vector<2x32xf32>
    %185 = vector.extract_strided_slice %147 {offsets = [0, 64], sizes = [2, 32], strides = [1, 1]} : vector<2x128xf32> to vector<2x32xf32>
    %186 = math.tanh %185 : vector<2x32xf32>
    %187 = vector.extract_strided_slice %147 {offsets = [0, 96], sizes = [2, 32], strides = [1, 1]} : vector<2x128xf32> to vector<2x32xf32>
    %188 = arith.negf %187 : vector<2x32xf32>
    %189 = math.exp %188 : vector<2x32xf32>
    %cst_56 = arith.constant 1.000000e+00 : f32
    %190 = vector.broadcast %cst_56 : f32 to vector<2x32xf32>
    %191 = arith.addf %190, %189 : vector<2x32xf32>
    %192 = arith.divf %190, %191 : vector<2x32xf32>
    %193 = arith.mulf %184, %134 : vector<2x32xf32>
    %194 = arith.mulf %178, %186 : vector<2x32xf32>
    %195 = arith.addf %193, %194 : vector<2x32xf32>
    %196 = math.tanh %195 : vector<2x32xf32>
    %197 = arith.mulf %192, %196 : vector<2x32xf32>
    %c4_57 = arith.constant 4 : index
    %c0_58 = arith.constant 0 : index
    %198 = vector.load %arg11[%c4_57, %c0_58] : memref<16x64xf32, #tpu.memory_space<vmem>>, vector<2x32xf32>
    tpu.vector_store %arg11[%c4_57, %c0_58], %172 {strides = array<i32>} : memref<16x64xf32, #tpu.memory_space<vmem>>, vector<2x32xf32>,
    %c10_59 = arith.constant 10 : index
    %c32_60 = arith.constant 32 : index
    %199 = vector.load %arg11[%c10_59, %c32_60] : memref<16x64xf32, #tpu.memory_space<vmem>>, vector<2x32xf32>
    tpu.vector_store %arg11[%c10_59, %c32_60], %197 {strides = array<i32>} : memref<16x64xf32, #tpu.memory_space<vmem>>, vector<2x32xf32>,
    %200 = tpu.concatenate %172, %197 in 1 : vector<2x32xf32>, vector<2x32xf32> -> vector<2x64xf32>
    %c0_61 = arith.constant 0 : index
    %c0_62 = arith.constant 0 : index
    %201 = vector.load %arg6[%c0_61, %c0_62] : memref<64x256xf32, #tpu.memory_space<vmem>>, vector<64x256xf32>
    %cst_63 = arith.constant dense<0.000000e+00> : vector<2x256xf32>
    %202 = tpu.matmul %200, %201, %cst_63 {dimension_numbers = #tpu.dot_dimension_numbers<[1], [0], [0], [1], [0, 0, 1, 1], [], []>} : vector<2x64xf32>, vector<64x256xf32>, vector<2x256xf32> -> vector<2x256xf32>
    %c6 = arith.constant 6 : index
    %c0_64 = arith.constant 0 : index
    %203 = vector.load %arg10[%c6, %c0_64] : memref<16x256xf32, #tpu.memory_space<vmem>>, vector<2x128xf32>
    %204 = vector.extract_strided_slice %202 {offsets = [0, 0], sizes = [2, 128], strides = [1, 1]} : vector<2x256xf32> to vector<2x128xf32>
    %205 = arith.addf %203, %204 : vector<2x128xf32>
    %c8 = arith.constant 8 : index
    %c128_65 = arith.constant 128 : index
    %206 = vector.load %arg10[%c8, %c128_65] : memref<16x256xf32, #tpu.memory_space<vmem>>, vector<2x128xf32>
    %207 = vector.extract_strided_slice %202 {offsets = [0, 128], sizes = [2, 128], strides = [1, 1]} : vector<2x256xf32> to vector<2x128xf32>
    %208 = arith.addf %206, %207 : vector<2x128xf32>
    %209 = vector.extract_strided_slice %205 {offsets = [0, 0], sizes = [2, 32], strides = [1, 1]} : vector<2x128xf32> to vector<2x32xf32>
    %210 = arith.negf %209 : vector<2x32xf32>
    %211 = math.exp %210 : vector<2x32xf32>
    %cst_66 = arith.constant 1.000000e+00 : f32
    %212 = vector.broadcast %cst_66 : f32 to vector<2x32xf32>
    %213 = arith.addf %212, %211 : vector<2x32xf32>
    %214 = arith.divf %212, %213 : vector<2x32xf32>
    %215 = vector.extract_strided_slice %205 {offsets = [0, 32], sizes = [2, 32], strides = [1, 1]} : vector<2x128xf32> to vector<2x32xf32>
    %216 = arith.negf %215 : vector<2x32xf32>
    %217 = math.exp %216 : vector<2x32xf32>
    %cst_67 = arith.constant 1.000000e+00 : f32
    %218 = vector.broadcast %cst_67 : f32 to vector<2x32xf32>
    %219 = arith.addf %218, %217 : vector<2x32xf32>
    %220 = arith.divf %218, %219 : vector<2x32xf32>
    %221 = vector.extract_strided_slice %205 {offsets = [0, 64], sizes = [2, 32], strides = [1, 1]} : vector<2x128xf32> to vector<2x32xf32>
    %222 = math.tanh %221 : vector<2x32xf32>
    %223 = vector.extract_strided_slice %205 {offsets = [0, 96], sizes = [2, 32], strides = [1, 1]} : vector<2x128xf32> to vector<2x32xf32>
    %224 = arith.negf %223 : vector<2x32xf32>
    %225 = math.exp %224 : vector<2x32xf32>
    %cst_68 = arith.constant 1.000000e+00 : f32
    %226 = vector.broadcast %cst_68 : f32 to vector<2x32xf32>
    %227 = arith.addf %226, %225 : vector<2x32xf32>
    %228 = arith.divf %226, %227 : vector<2x32xf32>
    %229 = arith.mulf %220, %170 : vector<2x32xf32>
    %230 = arith.mulf %214, %222 : vector<2x32xf32>
    %231 = arith.addf %229, %230 : vector<2x32xf32>
    %232 = math.tanh %231 : vector<2x32xf32>
    %233 = arith.mulf %228, %232 : vector<2x32xf32>
    %234 = vector.extract_strided_slice %208 {offsets = [0, 0], sizes = [2, 32], strides = [1, 1]} : vector<2x128xf32> to vector<2x32xf32>
    %235 = arith.negf %234 : vector<2x32xf32>
    %236 = math.exp %235 : vector<2x32xf32>
    %cst_69 = arith.constant 1.000000e+00 : f32
    %237 = vector.broadcast %cst_69 : f32 to vector<2x32xf32>
    %238 = arith.addf %237, %236 : vector<2x32xf32>
    %239 = arith.divf %237, %238 : vector<2x32xf32>
    %240 = vector.extract_strided_slice %208 {offsets = [0, 32], sizes = [2, 32], strides = [1, 1]} : vector<2x128xf32> to vector<2x32xf32>
    %241 = arith.negf %240 : vector<2x32xf32>
    %242 = math.exp %241 : vector<2x32xf32>
    %cst_70 = arith.constant 1.000000e+00 : f32
    %243 = vector.broadcast %cst_70 : f32 to vector<2x32xf32>
    %244 = arith.addf %243, %242 : vector<2x32xf32>
    %245 = arith.divf %243, %244 : vector<2x32xf32>
    %246 = vector.extract_strided_slice %208 {offsets = [0, 64], sizes = [2, 32], strides = [1, 1]} : vector<2x128xf32> to vector<2x32xf32>
    %247 = math.tanh %246 : vector<2x32xf32>
    %248 = vector.extract_strided_slice %208 {offsets = [0, 96], sizes = [2, 32], strides = [1, 1]} : vector<2x128xf32> to vector<2x32xf32>
    %249 = arith.negf %248 : vector<2x32xf32>
    %250 = math.exp %249 : vector<2x32xf32>
    %cst_71 = arith.constant 1.000000e+00 : f32
    %251 = vector.broadcast %cst_71 : f32 to vector<2x32xf32>
    %252 = arith.addf %251, %250 : vector<2x32xf32>
    %253 = arith.divf %251, %252 : vector<2x32xf32>
    %254 = arith.mulf %245, %195 : vector<2x32xf32>
    %255 = arith.mulf %239, %247 : vector<2x32xf32>
    %256 = arith.addf %254, %255 : vector<2x32xf32>
    %257 = math.tanh %256 : vector<2x32xf32>
    %258 = arith.mulf %253, %257 : vector<2x32xf32>
    %c6_72 = arith.constant 6 : index
    %c0_73 = arith.constant 0 : index
    %259 = vector.load %arg11[%c6_72, %c0_73] : memref<16x64xf32, #tpu.memory_space<vmem>>, vector<2x32xf32>
    tpu.vector_store %arg11[%c6_72, %c0_73], %233 {strides = array<i32>} : memref<16x64xf32, #tpu.memory_space<vmem>>, vector<2x32xf32>,
    %c8_74 = arith.constant 8 : index
    %c32_75 = arith.constant 32 : index
    %260 = vector.load %arg11[%c8_74, %c32_75] : memref<16x64xf32, #tpu.memory_space<vmem>>, vector<2x32xf32>
    tpu.vector_store %arg11[%c8_74, %c32_75], %258 {strides = array<i32>} : memref<16x64xf32, #tpu.memory_space<vmem>>, vector<2x32xf32>,
    %261 = tpu.concatenate %233, %258 in 1 : vector<2x32xf32>, vector<2x32xf32> -> vector<2x64xf32>
    %c0_76 = arith.constant 0 : index
    %c0_77 = arith.constant 0 : index
    %262 = vector.load %arg6[%c0_76, %c0_77] : memref<64x256xf32, #tpu.memory_space<vmem>>, vector<64x256xf32>
    %cst_78 = arith.constant dense<0.000000e+00> : vector<2x256xf32>
    %263 = tpu.matmul %261, %262, %cst_78 {dimension_numbers = #tpu.dot_dimension_numbers<[1], [0], [0], [1], [0, 0, 1, 1], [], []>} : vector<2x64xf32>, vector<64x256xf32>, vector<2x256xf32> -> vector<2x256xf32>
    %c8_79 = arith.constant 8 : index
    %c0_80 = arith.constant 0 : index
    %264 = vector.load %arg10[%c8_79, %c0_80] : memref<16x256xf32, #tpu.memory_space<vmem>>, vector<2x128xf32>
    %265 = vector.extract_strided_slice %263 {offsets = [0, 0], sizes = [2, 128], strides = [1, 1]} : vector<2x256xf32> to vector<2x128xf32>
    %266 = arith.addf %264, %265 : vector<2x128xf32>
    %c6_81 = arith.constant 6 : index
    %c128_82 = arith.constant 128 : index
    %267 = vector.load %arg10[%c6_81, %c128_82] : memref<16x256xf32, #tpu.memory_space<vmem>>, vector<2x128xf32>
    %268 = vector.extract_strided_slice %263 {offsets = [0, 128], sizes = [2, 128], strides = [1, 1]} : vector<2x256xf32> to vector<2x128xf32>
    %269 = arith.addf %267, %268 : vector<2x128xf32>
    %270 = vector.extract_strided_slice %266 {offsets = [0, 0], sizes = [2, 32], strides = [1, 1]} : vector<2x128xf32> to vector<2x32xf32>
    %271 = arith.negf %270 : vector<2x32xf32>
    %272 = math.exp %271 : vector<2x32xf32>
    %cst_83 = arith.constant 1.000000e+00 : f32
    %273 = vector.broadcast %cst_83 : f32 to vector<2x32xf32>
    %274 = arith.addf %273, %272 : vector<2x32xf32>
    %275 = arith.divf %273, %274 : vector<2x32xf32>
    %276 = vector.extract_strided_slice %266 {offsets = [0, 32], sizes = [2, 32], strides = [1, 1]} : vector<2x128xf32> to vector<2x32xf32>
    %277 = arith.negf %276 : vector<2x32xf32>
    %278 = math.exp %277 : vector<2x32xf32>
    %cst_84 = arith.constant 1.000000e+00 : f32
    %279 = vector.broadcast %cst_84 : f32 to vector<2x32xf32>
    %280 = arith.addf %279, %278 : vector<2x32xf32>
    %281 = arith.divf %279, %280 : vector<2x32xf32>
    %282 = vector.extract_strided_slice %266 {offsets = [0, 64], sizes = [2, 32], strides = [1, 1]} : vector<2x128xf32> to vector<2x32xf32>
    %283 = math.tanh %282 : vector<2x32xf32>
    %284 = vector.extract_strided_slice %266 {offsets = [0, 96], sizes = [2, 32], strides = [1, 1]} : vector<2x128xf32> to vector<2x32xf32>
    %285 = arith.negf %284 : vector<2x32xf32>
    %286 = math.exp %285 : vector<2x32xf32>
    %cst_85 = arith.constant 1.000000e+00 : f32
    %287 = vector.broadcast %cst_85 : f32 to vector<2x32xf32>
    %288 = arith.addf %287, %286 : vector<2x32xf32>
    %289 = arith.divf %287, %288 : vector<2x32xf32>
    %290 = arith.mulf %281, %231 : vector<2x32xf32>
    %291 = arith.mulf %275, %283 : vector<2x32xf32>
    %292 = arith.addf %290, %291 : vector<2x32xf32>
    %293 = math.tanh %292 : vector<2x32xf32>
    %294 = arith.mulf %289, %293 : vector<2x32xf32>
    %295 = vector.extract_strided_slice %269 {offsets = [0, 0], sizes = [2, 32], strides = [1, 1]} : vector<2x128xf32> to vector<2x32xf32>
    %296 = arith.negf %295 : vector<2x32xf32>
    %297 = math.exp %296 : vector<2x32xf32>
    %cst_86 = arith.constant 1.000000e+00 : f32
    %298 = vector.broadcast %cst_86 : f32 to vector<2x32xf32>
    %299 = arith.addf %298, %297 : vector<2x32xf32>
    %300 = arith.divf %298, %299 : vector<2x32xf32>
    %301 = vector.extract_strided_slice %269 {offsets = [0, 32], sizes = [2, 32], strides = [1, 1]} : vector<2x128xf32> to vector<2x32xf32>
    %302 = arith.negf %301 : vector<2x32xf32>
    %303 = math.exp %302 : vector<2x32xf32>
    %cst_87 = arith.constant 1.000000e+00 : f32
    %304 = vector.broadcast %cst_87 : f32 to vector<2x32xf32>
    %305 = arith.addf %304, %303 : vector<2x32xf32>
    %306 = arith.divf %304, %305 : vector<2x32xf32>
    %307 = vector.extract_strided_slice %269 {offsets = [0, 64], sizes = [2, 32], strides = [1, 1]} : vector<2x128xf32> to vector<2x32xf32>
    %308 = math.tanh %307 : vector<2x32xf32>
    %309 = vector.extract_strided_slice %269 {offsets = [0, 96], sizes = [2, 32], strides = [1, 1]} : vector<2x128xf32> to vector<2x32xf32>
    %310 = arith.negf %309 : vector<2x32xf32>
    %311 = math.exp %310 : vector<2x32xf32>
    %cst_88 = arith.constant 1.000000e+00 : f32
    %312 = vector.broadcast %cst_88 : f32 to vector<2x32xf32>
    %313 = arith.addf %312, %311 : vector<2x32xf32>
    %314 = arith.divf %312, %313 : vector<2x32xf32>
    %315 = arith.mulf %306, %256 : vector<2x32xf32>
    %316 = arith.mulf %300, %308 : vector<2x32xf32>
    %317 = arith.addf %315, %316 : vector<2x32xf32>
    %318 = math.tanh %317 : vector<2x32xf32>
    %319 = arith.mulf %314, %318 : vector<2x32xf32>
    %c8_89 = arith.constant 8 : index
    %c0_90 = arith.constant 0 : index
    %320 = vector.load %arg11[%c8_89, %c0_90] : memref<16x64xf32, #tpu.memory_space<vmem>>, vector<2x32xf32>
    tpu.vector_store %arg11[%c8_89, %c0_90], %294 {strides = array<i32>} : memref<16x64xf32, #tpu.memory_space<vmem>>, vector<2x32xf32>,
    %c6_91 = arith.constant 6 : index
    %c32_92 = arith.constant 32 : index
    %321 = vector.load %arg11[%c6_91, %c32_92] : memref<16x64xf32, #tpu.memory_space<vmem>>, vector<2x32xf32>
    tpu.vector_store %arg11[%c6_91, %c32_92], %319 {strides = array<i32>} : memref<16x64xf32, #tpu.memory_space<vmem>>, vector<2x32xf32>,
    %322 = tpu.concatenate %294, %319 in 1 : vector<2x32xf32>, vector<2x32xf32> -> vector<2x64xf32>
    %c0_93 = arith.constant 0 : index
    %c0_94 = arith.constant 0 : index
    %323 = vector.load %arg6[%c0_93, %c0_94] : memref<64x256xf32, #tpu.memory_space<vmem>>, vector<64x256xf32>
    %cst_95 = arith.constant dense<0.000000e+00> : vector<2x256xf32>
    %324 = tpu.matmul %322, %323, %cst_95 {dimension_numbers = #tpu.dot_dimension_numbers<[1], [0], [0], [1], [0, 0, 1, 1], [], []>} : vector<2x64xf32>, vector<64x256xf32>, vector<2x256xf32> -> vector<2x256xf32>
    %c10_96 = arith.constant 10 : index
    %c0_97 = arith.constant 0 : index
    %325 = vector.load %arg10[%c10_96, %c0_97] : memref<16x256xf32, #tpu.memory_space<vmem>>, vector<2x128xf32>
    %326 = vector.extract_strided_slice %324 {offsets = [0, 0], sizes = [2, 128], strides = [1, 1]} : vector<2x256xf32> to vector<2x128xf32>
    %327 = arith.addf %325, %326 : vector<2x128xf32>
    %c4_98 = arith.constant 4 : index
    %c128_99 = arith.constant 128 : index
    %328 = vector.load %arg10[%c4_98, %c128_99] : memref<16x256xf32, #tpu.memory_space<vmem>>, vector<2x128xf32>
    %329 = vector.extract_strided_slice %324 {offsets = [0, 128], sizes = [2, 128], strides = [1, 1]} : vector<2x256xf32> to vector<2x128xf32>
    %330 = arith.addf %328, %329 : vector<2x128xf32>
    %331 = vector.extract_strided_slice %327 {offsets = [0, 0], sizes = [2, 32], strides = [1, 1]} : vector<2x128xf32> to vector<2x32xf32>
    %332 = arith.negf %331 : vector<2x32xf32>
    %333 = math.exp %332 : vector<2x32xf32>
    %cst_100 = arith.constant 1.000000e+00 : f32
    %334 = vector.broadcast %cst_100 : f32 to vector<2x32xf32>
    %335 = arith.addf %334, %333 : vector<2x32xf32>
    %336 = arith.divf %334, %335 : vector<2x32xf32>
    %337 = vector.extract_strided_slice %327 {offsets = [0, 32], sizes = [2, 32], strides = [1, 1]} : vector<2x128xf32> to vector<2x32xf32>
    %338 = arith.negf %337 : vector<2x32xf32>
    %339 = math.exp %338 : vector<2x32xf32>
    %cst_101 = arith.constant 1.000000e+00 : f32
    %340 = vector.broadcast %cst_101 : f32 to vector<2x32xf32>
    %341 = arith.addf %340, %339 : vector<2x32xf32>
    %342 = arith.divf %340, %341 : vector<2x32xf32>
    %343 = vector.extract_strided_slice %327 {offsets = [0, 64], sizes = [2, 32], strides = [1, 1]} : vector<2x128xf32> to vector<2x32xf32>
    %344 = math.tanh %343 : vector<2x32xf32>
    %345 = vector.extract_strided_slice %327 {offsets = [0, 96], sizes = [2, 32], strides = [1, 1]} : vector<2x128xf32> to vector<2x32xf32>
    %346 = arith.negf %345 : vector<2x32xf32>
    %347 = math.exp %346 : vector<2x32xf32>
    %cst_102 = arith.constant 1.000000e+00 : f32
    %348 = vector.broadcast %cst_102 : f32 to vector<2x32xf32>
    %349 = arith.addf %348, %347 : vector<2x32xf32>
    %350 = arith.divf %348, %349 : vector<2x32xf32>
    %351 = arith.mulf %342, %292 : vector<2x32xf32>
    %352 = arith.mulf %336, %344 : vector<2x32xf32>
    %353 = arith.addf %351, %352 : vector<2x32xf32>
    %354 = math.tanh %353 : vector<2x32xf32>
    %355 = arith.mulf %350, %354 : vector<2x32xf32>
    %356 = vector.extract_strided_slice %330 {offsets = [0, 0], sizes = [2, 32], strides = [1, 1]} : vector<2x128xf32> to vector<2x32xf32>
    %357 = arith.negf %356 : vector<2x32xf32>
    %358 = math.exp %357 : vector<2x32xf32>
    %cst_103 = arith.constant 1.000000e+00 : f32
    %359 = vector.broadcast %cst_103 : f32 to vector<2x32xf32>
    %360 = arith.addf %359, %358 : vector<2x32xf32>
    %361 = arith.divf %359, %360 : vector<2x32xf32>
    %362 = vector.extract_strided_slice %330 {offsets = [0, 32], sizes = [2, 32], strides = [1, 1]} : vector<2x128xf32> to vector<2x32xf32>
    %363 = arith.negf %362 : vector<2x32xf32>
    %364 = math.exp %363 : vector<2x32xf32>
    %cst_104 = arith.constant 1.000000e+00 : f32
    %365 = vector.broadcast %cst_104 : f32 to vector<2x32xf32>
    %366 = arith.addf %365, %364 : vector<2x32xf32>
    %367 = arith.divf %365, %366 : vector<2x32xf32>
    %368 = vector.extract_strided_slice %330 {offsets = [0, 64], sizes = [2, 32], strides = [1, 1]} : vector<2x128xf32> to vector<2x32xf32>
    %369 = math.tanh %368 : vector<2x32xf32>
    %370 = vector.extract_strided_slice %330 {offsets = [0, 96], sizes = [2, 32], strides = [1, 1]} : vector<2x128xf32> to vector<2x32xf32>
    %371 = arith.negf %370 : vector<2x32xf32>
    %372 = math.exp %371 : vector<2x32xf32>
    %cst_105 = arith.constant 1.000000e+00 : f32
    %373 = vector.broadcast %cst_105 : f32 to vector<2x32xf32>
    %374 = arith.addf %373, %372 : vector<2x32xf32>
    %375 = arith.divf %373, %374 : vector<2x32xf32>
    %376 = arith.mulf %367, %317 : vector<2x32xf32>
    %377 = arith.mulf %361, %369 : vector<2x32xf32>
    %378 = arith.addf %376, %377 : vector<2x32xf32>
    %379 = math.tanh %378 : vector<2x32xf32>
    %380 = arith.mulf %375, %379 : vector<2x32xf32>
    %c10_106 = arith.constant 10 : index
    %c0_107 = arith.constant 0 : index
    %381 = vector.load %arg11[%c10_106, %c0_107] : memref<16x64xf32, #tpu.memory_space<vmem>>, vector<2x32xf32>
    tpu.vector_store %arg11[%c10_106, %c0_107], %355 {strides = array<i32>} : memref<16x64xf32, #tpu.memory_space<vmem>>, vector<2x32xf32>,
    %c4_108 = arith.constant 4 : index
    %c32_109 = arith.constant 32 : index
    %382 = vector.load %arg11[%c4_108, %c32_109] : memref<16x64xf32, #tpu.memory_space<vmem>>, vector<2x32xf32>
    tpu.vector_store %arg11[%c4_108, %c32_109], %380 {strides = array<i32>} : memref<16x64xf32, #tpu.memory_space<vmem>>, vector<2x32xf32>,
    %383 = tpu.concatenate %355, %380 in 1 : vector<2x32xf32>, vector<2x32xf32> -> vector<2x64xf32>
    %c0_110 = arith.constant 0 : index
    %c0_111 = arith.constant 0 : index
    %384 = vector.load %arg6[%c0_110, %c0_111] : memref<64x256xf32, #tpu.memory_space<vmem>>, vector<64x256xf32>
    %cst_112 = arith.constant dense<0.000000e+00> : vector<2x256xf32>
    %385 = tpu.matmul %383, %384, %cst_112 {dimension_numbers = #tpu.dot_dimension_numbers<[1], [0], [0], [1], [0, 0, 1, 1], [], []>} : vector<2x64xf32>, vector<64x256xf32>, vector<2x256xf32> -> vector<2x256xf32>
    %c12_113 = arith.constant 12 : index
    %c0_114 = arith.constant 0 : index
    %386 = vector.load %arg10[%c12_113, %c0_114] : memref<16x256xf32, #tpu.memory_space<vmem>>, vector<2x128xf32>
    %387 = vector.extract_strided_slice %385 {offsets = [0, 0], sizes = [2, 128], strides = [1, 1]} : vector<2x256xf32> to vector<2x128xf32>
    %388 = arith.addf %386, %387 : vector<2x128xf32>
    %c2_115 = arith.constant 2 : index
    %c128_116 = arith.constant 128 : index
    %389 = vector.load %arg10[%c2_115, %c128_116] : memref<16x256xf32, #tpu.memory_space<vmem>>, vector<2x128xf32>
    %390 = vector.extract_strided_slice %385 {offsets = [0, 128], sizes = [2, 128], strides = [1, 1]} : vector<2x256xf32> to vector<2x128xf32>
    %391 = arith.addf %389, %390 : vector<2x128xf32>
    %392 = vector.extract_strided_slice %388 {offsets = [0, 0], sizes = [2, 32], strides = [1, 1]} : vector<2x128xf32> to vector<2x32xf32>
    %393 = arith.negf %392 : vector<2x32xf32>
    %394 = math.exp %393 : vector<2x32xf32>
    %cst_117 = arith.constant 1.000000e+00 : f32
    %395 = vector.broadcast %cst_117 : f32 to vector<2x32xf32>
    %396 = arith.addf %395, %394 : vector<2x32xf32>
    %397 = arith.divf %395, %396 : vector<2x32xf32>
    %398 = vector.extract_strided_slice %388 {offsets = [0, 32], sizes = [2, 32], strides = [1, 1]} : vector<2x128xf32> to vector<2x32xf32>
    %399 = arith.negf %398 : vector<2x32xf32>
    %400 = math.exp %399 : vector<2x32xf32>
    %cst_118 = arith.constant 1.000000e+00 : f32
    %401 = vector.broadcast %cst_118 : f32 to vector<2x32xf32>
    %402 = arith.addf %401, %400 : vector<2x32xf32>
    %403 = arith.divf %401, %402 : vector<2x32xf32>
    %404 = vector.extract_strided_slice %388 {offsets = [0, 64], sizes = [2, 32], strides = [1, 1]} : vector<2x128xf32> to vector<2x32xf32>
    %405 = math.tanh %404 : vector<2x32xf32>
    %406 = vector.extract_strided_slice %388 {offsets = [0, 96], sizes = [2, 32], strides = [1, 1]} : vector<2x128xf32> to vector<2x32xf32>
    %407 = arith.negf %406 : vector<2x32xf32>
    %408 = math.exp %407 : vector<2x32xf32>
    %cst_119 = arith.constant 1.000000e+00 : f32
    %409 = vector.broadcast %cst_119 : f32 to vector<2x32xf32>
    %410 = arith.addf %409, %408 : vector<2x32xf32>
    %411 = arith.divf %409, %410 : vector<2x32xf32>
    %412 = arith.mulf %403, %353 : vector<2x32xf32>
    %413 = arith.mulf %397, %405 : vector<2x32xf32>
    %414 = arith.addf %412, %413 : vector<2x32xf32>
    %415 = math.tanh %414 : vector<2x32xf32>
    %416 = arith.mulf %411, %415 : vector<2x32xf32>
    %417 = vector.extract_strided_slice %391 {offsets = [0, 0], sizes = [2, 32], strides = [1, 1]} : vector<2x128xf32> to vector<2x32xf32>
    %418 = arith.negf %417 : vector<2x32xf32>
    %419 = math.exp %418 : vector<2x32xf32>
    %cst_120 = arith.constant 1.000000e+00 : f32
    %420 = vector.broadcast %cst_120 : f32 to vector<2x32xf32>
    %421 = arith.addf %420, %419 : vector<2x32xf32>
    %422 = arith.divf %420, %421 : vector<2x32xf32>
    %423 = vector.extract_strided_slice %391 {offsets = [0, 32], sizes = [2, 32], strides = [1, 1]} : vector<2x128xf32> to vector<2x32xf32>
    %424 = arith.negf %423 : vector<2x32xf32>
    %425 = math.exp %424 : vector<2x32xf32>
    %cst_121 = arith.constant 1.000000e+00 : f32
    %426 = vector.broadcast %cst_121 : f32 to vector<2x32xf32>
    %427 = arith.addf %426, %425 : vector<2x32xf32>
    %428 = arith.divf %426, %427 : vector<2x32xf32>
    %429 = vector.extract_strided_slice %391 {offsets = [0, 64], sizes = [2, 32], strides = [1, 1]} : vector<2x128xf32> to vector<2x32xf32>
    %430 = math.tanh %429 : vector<2x32xf32>
    %431 = vector.extract_strided_slice %391 {offsets = [0, 96], sizes = [2, 32], strides = [1, 1]} : vector<2x128xf32> to vector<2x32xf32>
    %432 = arith.negf %431 : vector<2x32xf32>
    %433 = math.exp %432 : vector<2x32xf32>
    %cst_122 = arith.constant 1.000000e+00 : f32
    %434 = vector.broadcast %cst_122 : f32 to vector<2x32xf32>
    %435 = arith.addf %434, %433 : vector<2x32xf32>
    %436 = arith.divf %434, %435 : vector<2x32xf32>
    %437 = arith.mulf %428, %378 : vector<2x32xf32>
    %438 = arith.mulf %422, %430 : vector<2x32xf32>
    %439 = arith.addf %437, %438 : vector<2x32xf32>
    %440 = math.tanh %439 : vector<2x32xf32>
    %441 = arith.mulf %436, %440 : vector<2x32xf32>
    %c12_123 = arith.constant 12 : index
    %c0_124 = arith.constant 0 : index
    %442 = vector.load %arg11[%c12_123, %c0_124] : memref<16x64xf32, #tpu.memory_space<vmem>>, vector<2x32xf32>
    tpu.vector_store %arg11[%c12_123, %c0_124], %416 {strides = array<i32>} : memref<16x64xf32, #tpu.memory_space<vmem>>, vector<2x32xf32>,
    %c2_125 = arith.constant 2 : index
    %c32_126 = arith.constant 32 : index
    %443 = vector.load %arg11[%c2_125, %c32_126] : memref<16x64xf32, #tpu.memory_space<vmem>>, vector<2x32xf32>
    tpu.vector_store %arg11[%c2_125, %c32_126], %441 {strides = array<i32>} : memref<16x64xf32, #tpu.memory_space<vmem>>, vector<2x32xf32>,
    %444 = tpu.concatenate %416, %441 in 1 : vector<2x32xf32>, vector<2x32xf32> -> vector<2x64xf32>
    %c0_127 = arith.constant 0 : index
    %c0_128 = arith.constant 0 : index
    %445 = vector.load %arg6[%c0_127, %c0_128] : memref<64x256xf32, #tpu.memory_space<vmem>>, vector<64x256xf32>
    %cst_129 = arith.constant dense<0.000000e+00> : vector<2x256xf32>
    %446 = tpu.matmul %444, %445, %cst_129 {dimension_numbers = #tpu.dot_dimension_numbers<[1], [0], [0], [1], [0, 0, 1, 1], [], []>} : vector<2x64xf32>, vector<64x256xf32>, vector<2x256xf32> -> vector<2x256xf32>
    %c14_130 = arith.constant 14 : index
    %c0_131 = arith.constant 0 : index
    %447 = vector.load %arg10[%c14_130, %c0_131] : memref<16x256xf32, #tpu.memory_space<vmem>>, vector<2x128xf32>
    %448 = vector.extract_strided_slice %446 {offsets = [0, 0], sizes = [2, 128], strides = [1, 1]} : vector<2x256xf32> to vector<2x128xf32>
    %449 = arith.addf %447, %448 : vector<2x128xf32>
    %c0_132 = arith.constant 0 : index
    %c128_133 = arith.constant 128 : index
    %450 = vector.load %arg10[%c0_132, %c128_133] : memref<16x256xf32, #tpu.memory_space<vmem>>, vector<2x128xf32>
    %451 = vector.extract_strided_slice %446 {offsets = [0, 128], sizes = [2, 128], strides = [1, 1]} : vector<2x256xf32> to vector<2x128xf32>
    %452 = arith.addf %450, %451 : vector<2x128xf32>
    %453 = vector.extract_strided_slice %449 {offsets = [0, 0], sizes = [2, 32], strides = [1, 1]} : vector<2x128xf32> to vector<2x32xf32>
    %454 = arith.negf %453 : vector<2x32xf32>
    %455 = math.exp %454 : vector<2x32xf32>
    %cst_134 = arith.constant 1.000000e+00 : f32
    %456 = vector.broadcast %cst_134 : f32 to vector<2x32xf32>
    %457 = arith.addf %456, %455 : vector<2x32xf32>
    %458 = arith.divf %456, %457 : vector<2x32xf32>
    %459 = vector.extract_strided_slice %449 {offsets = [0, 32], sizes = [2, 32], strides = [1, 1]} : vector<2x128xf32> to vector<2x32xf32>
    %460 = arith.negf %459 : vector<2x32xf32>
    %461 = math.exp %460 : vector<2x32xf32>
    %cst_135 = arith.constant 1.000000e+00 : f32
    %462 = vector.broadcast %cst_135 : f32 to vector<2x32xf32>
    %463 = arith.addf %462, %461 : vector<2x32xf32>
    %464 = arith.divf %462, %463 : vector<2x32xf32>
    %465 = vector.extract_strided_slice %449 {offsets = [0, 64], sizes = [2, 32], strides = [1, 1]} : vector<2x128xf32> to vector<2x32xf32>
    %466 = math.tanh %465 : vector<2x32xf32>
    %467 = vector.extract_strided_slice %449 {offsets = [0, 96], sizes = [2, 32], strides = [1, 1]} : vector<2x128xf32> to vector<2x32xf32>
    %468 = arith.negf %467 : vector<2x32xf32>
    %469 = math.exp %468 : vector<2x32xf32>
    %cst_136 = arith.constant 1.000000e+00 : f32
    %470 = vector.broadcast %cst_136 : f32 to vector<2x32xf32>
    %471 = arith.addf %470, %469 : vector<2x32xf32>
    %472 = arith.divf %470, %471 : vector<2x32xf32>
    %473 = arith.mulf %464, %414 : vector<2x32xf32>
    %474 = arith.mulf %458, %466 : vector<2x32xf32>
    %475 = arith.addf %473, %474 : vector<2x32xf32>
    %476 = math.tanh %475 : vector<2x32xf32>
    %477 = arith.mulf %472, %476 : vector<2x32xf32>
    %478 = vector.extract_strided_slice %452 {offsets = [0, 0], sizes = [2, 32], strides = [1, 1]} : vector<2x128xf32> to vector<2x32xf32>
    %479 = arith.negf %478 : vector<2x32xf32>
    %480 = math.exp %479 : vector<2x32xf32>
    %cst_137 = arith.constant 1.000000e+00 : f32
    %481 = vector.broadcast %cst_137 : f32 to vector<2x32xf32>
    %482 = arith.addf %481, %480 : vector<2x32xf32>
    %483 = arith.divf %481, %482 : vector<2x32xf32>
    %484 = vector.extract_strided_slice %452 {offsets = [0, 32], sizes = [2, 32], strides = [1, 1]} : vector<2x128xf32> to vector<2x32xf32>
    %485 = arith.negf %484 : vector<2x32xf32>
    %486 = math.exp %485 : vector<2x32xf32>
    %cst_138 = arith.constant 1.000000e+00 : f32
    %487 = vector.broadcast %cst_138 : f32 to vector<2x32xf32>
    %488 = arith.addf %487, %486 : vector<2x32xf32>
    %489 = arith.divf %487, %488 : vector<2x32xf32>
    %490 = vector.extract_strided_slice %452 {offsets = [0, 64], sizes = [2, 32], strides = [1, 1]} : vector<2x128xf32> to vector<2x32xf32>
    %491 = math.tanh %490 : vector<2x32xf32>
    %492 = vector.extract_strided_slice %452 {offsets = [0, 96], sizes = [2, 32], strides = [1, 1]} : vector<2x128xf32> to vector<2x32xf32>
    %493 = arith.negf %492 : vector<2x32xf32>
    %494 = math.exp %493 : vector<2x32xf32>
    %cst_139 = arith.constant 1.000000e+00 : f32
    %495 = vector.broadcast %cst_139 : f32 to vector<2x32xf32>
    %496 = arith.addf %495, %494 : vector<2x32xf32>
    %497 = arith.divf %495, %496 : vector<2x32xf32>
    %498 = arith.mulf %489, %439 : vector<2x32xf32>
    %499 = arith.mulf %483, %491 : vector<2x32xf32>
    %500 = arith.addf %498, %499 : vector<2x32xf32>
    %501 = math.tanh %500 : vector<2x32xf32>
    %502 = arith.mulf %497, %501 : vector<2x32xf32>
    %c14_140 = arith.constant 14 : index
    %c0_141 = arith.constant 0 : index
    %503 = vector.load %arg11[%c14_140, %c0_141] : memref<16x64xf32, #tpu.memory_space<vmem>>, vector<2x32xf32>
    tpu.vector_store %arg11[%c14_140, %c0_141], %477 {strides = array<i32>} : memref<16x64xf32, #tpu.memory_space<vmem>>, vector<2x32xf32>,
    %c0_142 = arith.constant 0 : index
    %c32_143 = arith.constant 32 : index
    %504 = vector.load %arg11[%c0_142, %c32_143] : memref<16x64xf32, #tpu.memory_space<vmem>>, vector<2x32xf32>
    tpu.vector_store %arg11[%c0_142, %c32_143], %502 {strides = array<i32>} : memref<16x64xf32, #tpu.memory_space<vmem>>, vector<2x32xf32>,
    %c0_144 = arith.constant 0 : index
    %c0_145 = arith.constant 0 : index
    %505 = vector.load %arg11[%c0_144, %c0_145] : memref<16x64xf32, #tpu.memory_space<vmem>>, vector<16x64xf32>
    %c0_146 = arith.constant 0 : index
    %c0_147 = arith.constant 0 : index
    %506 = vector.load %arg7[%c0_146, %c0_147] : memref<64x128xf32, #tpu.memory_space<vmem>>, vector<64x128xf32>
    %cst_148 = arith.constant dense<0.000000e+00> : vector<16x128xf32>
    %507 = tpu.matmul %505, %506, %cst_148 {dimension_numbers = #tpu.dot_dimension_numbers<[1], [0], [0], [1], [0, 0, 1, 1], [], []>} : vector<16x64xf32>, vector<64x128xf32>, vector<16x128xf32> -> vector<16x128xf32>
    %c0_149 = arith.constant 0 : index
    %c0_150 = arith.constant 0 : index
    %508 = vector.load %arg8[%c0_149, %c0_150] : memref<1x128xf32, #tpu.memory_space<vmem>>, vector<1x128xf32>
    %509 = vector.broadcast %508 : vector<1x128xf32> to vector<16x128xf32>
    %510 = arith.addf %507, %509 : vector<16x128xf32>
    %c0_151 = arith.constant 0 : index
    %c0_152 = arith.constant 0 : index
    %511 = vector.load %arg9[%c0_151, %c0_152] : memref<16x128xf32, #tpu.memory_space<vmem>>, vector<16x128xf32>
    tpu.vector_store %arg9[%c0_151, %c0_152], %510 {strides = array<i32>} : memref<16x128xf32, #tpu.memory_space<vmem>>, vector<16x128xf32>,
    return
  }
}

</mosaic_0001>

<llo_original>
// kernel: tpu_custom_call.1
$region0: #{tpu_custom_call.1}
  #allocation0 [shape = 'u32[]', space=smem, size = 0x4, offset = 0x4, fixed_abs, tag = 'smem constant byte address 0x4 - core index']
  #allocation1 [shape = 'u32[144,128]{1,0:T(1,128)}', space=vmem, size = 0x12000, scoped, tag = 'internal scratch']
  #allocation2 [shape = 'f32[16,256]{1,0:T(8,128)}', space=vmem, size = 0x4000, scoped, tag = 'scratch operand']
  #allocation3 [shape = 'f32[16,64]{1,0:T(8,128)}', space=vmem, size = 0x2000, scoped, tag = 'scratch operand']
  %s0 = inlined_call_operand.vmem [shape: f32[16,32], index: 0, kind: input, shape index: {}]
  %s1 = inlined_call_operand.vmem [shape: f32[16,1], index: 1, kind: input, shape index: {}]
  %s2 = inlined_call_operand.hbm [shape: f32[32,32], index: 2, kind: input, shape index: {}]
  %s3 = inlined_call_operand.vmem [shape: f32[1,32], index: 3, kind: input, shape index: {}]
  %s4 = inlined_call_operand.hbm [shape: f32[32,256], index: 4, kind: input, shape index: {}]
  %s5 = inlined_call_operand.vmem [shape: f32[1,256], index: 5, kind: input, shape index: {}]
  %s6 = inlined_call_operand.hbm [shape: f32[64,256], index: 6, kind: input, shape index: {}]
  %s7 = inlined_call_operand.hbm [shape: f32[64,128], index: 7, kind: input, shape index: {}]
  %s8 = inlined_call_operand.vmem [shape: f32[1,128], index: 8, kind: input, shape index: {}]
  %s9 = inlined_call_operand.hbm [shape: f32[16,128], index: 9, kind: output, shape index: {}]
  %s10 = sld [smem:[#allocation0]]
  $region62: #{tpu_custom_call.1} parent=0
    _
  %s12 = ssub.s32 1, %s10
  %s13 = scalar_select 0, %s12, %s10
  $region1: #{tpu_custom_call.1} parent=0
    #allocation4 [shape = 'u8[16384]{0}', space=vmem, size = 0x4000, scoped, tag = 'input window, operand 2, single buffered']
    #allocation5 [shape = 's32[1]{0}', space=sflag, size = 0x4, scoped, tag = 'scoped memory for tpu_custom_call.1']
    #allocation6 [shape = 's32[1]{0}', space=sflag, size = 0x4, scoped, tag = 'scoped memory for tpu_custom_call.1']
    #allocation7 [shape = 'u8[32768]{0}', space=vmem, size = 0x8000, scoped, tag = 'input window, operand 4, single buffered']
    #allocation8 [shape = 's32[1]{0}', space=sflag, size = 0x4, scoped, tag = 'scoped memory for tpu_custom_call.1']
    #allocation9 [shape = 'u8[65536]{0}', space=vmem, size = 0x10000, scoped, tag = 'input window, operand 6, single buffered']
    #allocation10 [shape = 'u8[32768]{0}', space=vmem, size = 0x8000, scoped, tag = 'input window, operand 7, single buffered']
    #allocation11 [shape = 's32[1]{0}', space=sflag, size = 0x4, scoped, tag = 'scoped memory for tpu_custom_call.1']
    #allocation12 [shape = 'u8[8192]{0}', space=vmem, size = 0x2000, scoped, tag = 'output window, operand 0, single buffered']
    %14 = vsyncpa [#allocation5], 0
    %15 = vsyncpa [#allocation8], 0
    %16 = vsyncpa [#allocation11], 0
    %17 = vsyncpa [#allocation6], 0
    // Predicated region
    $region2: #{tpu_custom_call.1} parent=1 // pred_check
      _
    $region3: #{tpu_custom_call.1} parent=1 // pred_check_branch
      %19 = sbr.rel (0) target = $region5
    $region4: #{tpu_custom_call.1} parent=1 // pred_region
      _
    $region5: #{tpu_custom_call.1} parent=1 // pred_fallthru
      _
    // Predicated region
    $region6: #{tpu_custom_call.1} parent=1 // pred_check
      _
    $region7: #{tpu_custom_call.1} parent=1 // pred_check_branch
      %21 = sbr.rel (0) target = $region9
    $region8: #{tpu_custom_call.1} parent=1 // pred_region
      _
    $region9: #{tpu_custom_call.1} parent=1 // pred_fallthru
      _
    // Predicated region
    $region10: #{tpu_custom_call.1} parent=1 // pred_check
      _
    $region11: #{tpu_custom_call.1} parent=1 // pred_check_branch
      %23 = sbr.rel (0) target = $region13
    $region12: #{tpu_custom_call.1} parent=1 // pred_region
      %s25 = ssub.s32 512, 512
      %26 = vsyncadd [#allocation5], %s25
      %s27 = sshll.u32 [#allocation4], 4
      %s28 = int_to_ptr.vmem [resolvable:$true] %s27
      %33 = dma.hbm_to_vmem [thread:$0]  %s2, 512, %s28, [#allocation5], 128, 128, 8
    $region13: #{tpu_custom_call.1} parent=1 // pred_fallthru
      _
    // Predicated region
    $region14: #{tpu_custom_call.1} parent=1 // pred_check
      _
    $region15: #{tpu_custom_call.1} parent=1 // pred_check_branch
      %35 = sbr.rel (0) target = $region17
    $region16: #{tpu_custom_call.1} parent=1 // pred_region
      _
    $region17: #{tpu_custom_call.1} parent=1 // pred_fallthru
      _
    // Predicated region
    $region18: #{tpu_custom_call.1} parent=1 // pred_check
      _
    $region19: #{tpu_custom_call.1} parent=1 // pred_check_branch
      %37 = sbr.rel (0) target = $region21
    $region20: #{tpu_custom_call.1} parent=1 // pred_region
      %s39 = ssub.s32 1024, 1024
      %40 = vsyncadd [#allocation8], %s39
      %s41 = sshll.u32 [#allocation7], 4
      %s42 = int_to_ptr.vmem [resolvable:$true] %s41
      %47 = dma.hbm_to_vmem [thread:$0]  %s4, 1024, %s42, [#allocation8], 256, 256, 16
    $region21: #{tpu_custom_call.1} parent=1 // pred_fallthru
      _
    // Predicated region
    $region22: #{tpu_custom_call.1} parent=1 // pred_check
      _
    $region23: #{tpu_custom_call.1} parent=1 // pred_check_branch
      %49 = sbr.rel (0) target = $region25
    $region24: #{tpu_custom_call.1} parent=1 // pred_region
      _
    $region25: #{tpu_custom_call.1} parent=1 // pred_fallthru
      _
    // Predicated region
    $region26: #{tpu_custom_call.1} parent=1 // pred_check
      _
    $region27: #{tpu_custom_call.1} parent=1 // pred_check_branch
      %51 = sbr.rel (0) target = $region29
    $region28: #{tpu_custom_call.1} parent=1 // pred_region
      %s53 = ssub.s32 2048, 2048
      %54 = vsyncadd [#allocation8], %s53
      %s55 = sshll.u32 [#allocation9], 4
      %s56 = int_to_ptr.vmem [resolvable:$true] %s55
      %61 = dma.hbm_to_vmem [thread:$0]  %s6, 2048, %s56, [#allocation8], 256, 256, 16
    $region29: #{tpu_custom_call.1} parent=1 // pred_fallthru
      _
    // Predicated region
    $region30: #{tpu_custom_call.1} parent=1 // pred_check
      _
    $region31: #{tpu_custom_call.1} parent=1 // pred_check_branch
      %63 = sbr.rel (0) target = $region33
    $region32: #{tpu_custom_call.1} parent=1 // pred_region
      %s65 = ssub.s32 1024, 1024
      %66 = vsyncadd [#allocation11], %s65
      %s67 = sshll.u32 [#allocation10], 4
      %s68 = int_to_ptr.vmem [resolvable:$true] %s67
      %73 = dma.hbm_to_vmem [thread:$0]  %s7, 1024, %s68, [#allocation11], 128, 128, 8
    $region33: #{tpu_custom_call.1} parent=1 // pred_fallthru
      _
    // Predicated region
    $region34: #{tpu_custom_call.1} parent=1 // pred_check
      _
    $region35: #{tpu_custom_call.1} parent=1 // pred_check_branch
      %75 = sbr.rel (0) target = $region37
    $region36: #{tpu_custom_call.1} parent=1 // pred_region
      _
    $region37: #{tpu_custom_call.1} parent=1 // pred_fallthru
      _
    // Predicated region
    $region38: #{tpu_custom_call.1} parent=1 // pred_check
      _
    $region39: #{tpu_custom_call.1} parent=1 // pred_check_branch
      %77 = sbr.rel (0) target = $region41
    $region40: #{tpu_custom_call.1} parent=1 // pred_region
      %78 = dma.done [#allocation5], 512
    $region41: #{tpu_custom_call.1} parent=1 // pred_fallthru
      _
    // Predicated region
    $region42: #{tpu_custom_call.1} parent=1 // pred_check
      _
    $region43: #{tpu_custom_call.1} parent=1 // pred_check_branch
      %80 = sbr.rel (0) target = $region45
    $region44: #{tpu_custom_call.1} parent=1 // pred_region
      %81 = dma.done [#allocation8], 1024
    $region45: #{tpu_custom_call.1} parent=1 // pred_fallthru
      _
    // Predicated region
    $region46: #{tpu_custom_call.1} parent=1 // pred_check
      _
    $region47: #{tpu_custom_call.1} parent=1 // pred_check_branch
      %83 = sbr.rel (0) target = $region49
    $region48: #{tpu_custom_call.1} parent=1 // pred_region
      %84 = dma.done [#allocation8], 2048
    $region49: #{tpu_custom_call.1} parent=1 // pred_fallthru
      _
    // Predicated region
    $region50: #{tpu_custom_call.1} parent=1 // pred_check
      _
    $region51: #{tpu_custom_call.1} parent=1 // pred_check_branch
      %86 = sbr.rel (0) target = $region53
    $region52: #{tpu_custom_call.1} parent=1 // pred_region
      %87 = dma.done [#allocation11], 1024
    $region53: #{tpu_custom_call.1} parent=1 // pred_fallthru
      _
    %v88 = vld [vmem:[%s0] sm:$0xff]
    %v89 = vld [vmem:[%s0 + $0x8] sm:$0xff]
    %v90 = vld [vmem:[#allocation4] sm:$0xff]
    %v91 = vld [vmem:[#allocation4 + $0x8] sm:$0xff]
    %v92 = vld [vmem:[#allocation4 + $0x10] sm:$0xff]
    %v93 = vld [vmem:[#allocation4 + $0x18] sm:$0xff]
    %v94 = vld [vmem:[%s3] sm:$0x1]
    %v96 = vlaneseq
    %v97 = vshrl.u32 %v96, 7
    %v98 = vsub.s32 0, %v97
    %v99 = vrot.slane %v94, %v98
    %vm101 = vcmask 261120
    %v103 = vsel %vm101, %v88, 0
    %v106 = vsel %vm101, %v89, 0
    %108 = vmatprep.subr.mxu0 0.0
    %109 = vmatpush1.msra.mxu0 %v90
    %110 = vmatprep.subr.mxu0 0.0
    %111 = vmatpush1.msra.mxu0 %v91
    %112 = vmatprep.subr.mxu0 0.0
    %113 = vmatpush1.msra.mxu0 %v92
    %114 = vmatprep.subr.mxu0 0.0
    %115 = vmatpush1.msra.mxu0 %v93
    %116 = vmatprep.subr.mxu0 0.0
    %117 = vmatpush1.msra.mxu0 0.0
    %118 = vmatprep.subr.mxu0 0.0
    %119 = vmatpush1.msra.mxu0 0.0
    %120 = vmatprep.subr.mxu0 0.0
    %121 = vmatpush1.msra.mxu0 0.0
    %122 = vmatprep.subr.mxu0 0.0
    %123 = vmatpush1.msra.mxu0 0.0
    %124 = vmatprep.subr.mxu0 0.0
    %125 = vmatpush1.msra.mxu0 0.0
    %126 = vmatprep.subr.mxu0 0.0
    %127 = vmatpush1.msra.mxu0 0.0
    %128 = vmatprep.subr.mxu0 0.0
    %129 = vmatpush1.msra.mxu0 0.0
    %130 = vmatprep.subr.mxu0 0.0
    %131 = vmatpush1.msra.mxu0 0.0
    %132 = vmatprep.subr.mxu0 0.0
    %133 = vmatpush1.msra.mxu0 0.0
    %134 = vmatprep.subr.mxu0 0.0
    %135 = vmatpush1.msra.mxu0 0.0
    %136 = vmatprep.subr.mxu0 0.0
    %137 = vmatpush1.msra.mxu0 0.0
    %138 = vmatprep.subr.mxu0 0.0
    %139 = vmatpush1.msra.mxu0 0.0
    %140 = vmatprep.subr.mxu0 0.0
    %141 = vmatpush1.msra.mxu0 0.0
    %142 = vmatprep.subr.mxu0 0.0
    %143 = vmatpush1.msra.mxu0 0.0
    %144 = vmatprep.subr.mxu0 0.0
    %145 = vmatpush1.msra.mxu0 0.0
    %146 = vmatprep.subr.mxu0 0.0
    %147 = vmatpush1.msra.mxu0 0.0
    %148 = vmatprep.subr.mxu0 0.0
    %149 = vmatpush1.msra.mxu0 0.0
    %150 = vmatprep.subr.mxu0 0.0
    %151 = vmatpush1.msra.mxu0 0.0
    %152 = vmatprep.subr.mxu0 0.0
    %153 = vmatpush1.msra.mxu0 0.0
    %154 = vmatprep.subr.mxu0 0.0
    %155 = vmatpush1.msra.mxu0 0.0
    %156 = vmatprep.subr.mxu0 0.0
    %157 = vmatpush1.msra.mxu0 0.0
    %158 = vmatprep.subr.mxu0 0.0
    %159 = vmatpush1.msra.mxu0 0.0
    %160 = vmatprep.subr.mxu0 0.0
    %161 = vmatpush1.msra.mxu0 0.0
    %162 = vmatprep.subr.mxu0 0.0
    %163 = vmatpush1.msra.mxu0 0.0
    %164 = vmatprep.subr.mxu0 0.0
    %165 = vmatpush1.msra.mxu0 0.0
    %166 = vmatprep.subr.mxu0 0.0
    %167 = vmatpush1.msra.mxu0 0.0
    %168 = vmatprep.subr.mxu0 0.0
    %169 = vmatpush1.msra.mxu0 0.0
    %170 = vmatprep.subr.mxu0 0.0
    %171 = vmatpush1.msra.mxu0 0.0
    %172 = vmatprep.mubr.f32.mxu0 0.0
    %173 = vmatmul.mubr.f32.gmra.mrb[0].mxu0 %v103
    %v174 = vpop.f32.mrb[0].mxu0
    %v175 = vadd.f32 %v99, %v174
    %v176 = vpop.f32.mrb[0].mxu0
    %177 = vmatprep.mubr.f32.mxu0 0.0
    %178 = vmatmul.mubr.f32.gmra.mrb[0].mxu0 %v106
    %v179 = vpop.f32.mrb[0].mxu0
    %v180 = vadd.f32 %v99, %v179
    %v181 = vpop.f32.mrb[0].mxu0
    %182 = vdwg.mxu0
    %v183 = vld [vmem:[%s1] sm:$0xff]
    %v184 = vld [vmem:[%s1 + $0x8] sm:$0xff]
    %186 = vset.pattern.permute.xlu0 0
    %187 = vperm.xlu0 %186, %v183
    %v188 = vpop.permute.xlu0 %187
    %191 = vset.pattern.permute.xlu0 0
    %192 = vperm.xlu0 %191, %v184
    %v193 = vpop.permute.xlu0 %192
    %v195 = vmul.f32 %v175, %v188
    %v196 = vmul.f32 %v180, %v193
    %v197 = vld [vmem:[#allocation7] sm:$0xff]
    %v198 = vld [vmem:[#allocation7 + $0x8] sm:$0xff]
    %v199 = vld [vmem:[#allocation7 + $0x10] sm:$0xff]
    %v200 = vld [vmem:[#allocation7 + $0x18] sm:$0xff]
    %v201 = vld [vmem:[#allocation7 + $0x20] sm:$0xff]
    %v202 = vld [vmem:[#allocation7 + $0x28] sm:$0xff]
    %v203 = vld [vmem:[#allocation7 + $0x30] sm:$0xff]
    %v204 = vld [vmem:[#allocation7 + $0x38] sm:$0xff]
    %v205 = vld [vmem:[%s5] sm:$0x3]
    %v207 = vlaneseq
    %v208 = vshrl.u32 %v207, 7
    %v209 = vsub.s32 0, %v208
    %v210 = vrot.slane %v205, %v209
    %v211 = vlaneseq
    %v212 = vshrl.u32 %v211, 7
    %v213 = vsub.s32 1, %v212
    %v214 = vrot.slane %v205, %v213
    %v218 = vsel %vm101, %v195, 0
    %v221 = vsel %vm101, %v196, 0
    %223 = vmatprep.subr.mxu0 %v198
    %224 = vmatpush1.msra.mxu0 %v197
    %225 = vmatprep.subr.mxu0 %v200
    %226 = vmatpush1.msra.mxu0 %v199
    %227 = vmatprep.subr.mxu0 %v202
    %228 = vmatpush1.msra.mxu0 %v201
    %229 = vmatprep.subr.mxu0 %v204
    %230 = vmatpush1.msra.mxu0 %v203
    %231 = vmatprep.subr.mxu0 0.0
    %232 = vmatpush1.msra.mxu0 0.0
    %233 = vmatprep.subr.mxu0 0.0
    %234 = vmatpush1.msra.mxu0 0.0
    %235 = vmatprep.subr.mxu0 0.0
    %236 = vmatpush1.msra.mxu0 0.0
    %237 = vmatprep.subr.mxu0 0.0
    %238 = vmatpush1.msra.mxu0 0.0
    %239 = vmatprep.subr.mxu0 0.0
    %240 = vmatpush1.msra.mxu0 0.0
    %241 = vmatprep.subr.mxu0 0.0
    %242 = vmatpush1.msra.mxu0 0.0
    %243 = vmatprep.subr.mxu0 0.0
    %244 = vmatpush1.msra.mxu0 0.0
    %245 = vmatprep.subr.mxu0 0.0
    %246 = vmatpush1.msra.mxu0 0.0
    %247 = vmatprep.subr.mxu0 0.0
    %248 = vmatpush1.msra.mxu0 0.0
    %249 = vmatprep.subr.mxu0 0.0
    %250 = vmatpush1.msra.mxu0 0.0
    %251 = vmatprep.subr.mxu0 0.0
    %252 = vmatpush1.msra.mxu0 0.0
    %253 = vmatprep.subr.mxu0 0.0
    %254 = vmatpush1.msra.mxu0 0.0
    %255 = vmatprep.subr.mxu0 0.0
    %256 = vmatpush1.msra.mxu0 0.0
    %257 = vmatprep.subr.mxu0 0.0
    %258 = vmatpush1.msra.mxu0 0.0
    %259 = vmatprep.subr.mxu0 0.0
    %260 = vmatpush1.msra.mxu0 0.0
    %261 = vmatprep.subr.mxu0 0.0
    %262 = vmatpush1.msra.mxu0 0.0
    %263 = vmatprep.subr.mxu0 0.0
    %264 = vmatpush1.msra.mxu0 0.0
    %265 = vmatprep.subr.mxu0 0.0
    %266 = vmatpush1.msra.mxu0 0.0
    %267 = vmatprep.subr.mxu0 0.0
    %268 = vmatpush1.msra.mxu0 0.0
    %269 = vmatprep.subr.mxu0 0.0
    %270 = vmatpush1.msra.mxu0 0.0
    %271 = vmatprep.subr.mxu0 0.0
    %272 = vmatpush1.msra.mxu0 0.0
    %273 = vmatprep.subr.mxu0 0.0
    %274 = vmatpush1.msra.mxu0 0.0
    %275 = vmatprep.subr.mxu0 0.0
    %276 = vmatpush1.msra.mxu0 0.0
    %277 = vmatprep.subr.mxu0 0.0
    %278 = vmatpush1.msra.mxu0 0.0
    %279 = vmatprep.subr.mxu0 0.0
    %280 = vmatpush1.msra.mxu0 0.0
    %281 = vmatprep.subr.mxu0 0.0
    %282 = vmatpush1.msra.mxu0 0.0
    %283 = vmatprep.subr.mxu0 0.0
    %284 = vmatpush1.msra.mxu0 0.0
    %285 = vmatprep.subr.mxu0 0.0
    %286 = vmatpush1.msra.mxu0 0.0
    %287 = vmatprep.mubr.f32.mxu0 0.0
    %288 = vmatmul.mubr.f32.gmra.mrb[0].mxu0 %v218
    %v289 = vpop.f32.mrb[0].mxu0
    %v290 = vadd.f32 %v210, %v289
    %v291 = vpop.f32.mrb[0].mxu0
    %v292 = vadd.f32 %v214, %v291
    %293 = vmatprep.mubr.f32.mxu0 0.0
    %294 = vmatmul.mubr.f32.gmra.mrb[0].mxu0 %v221
    %v295 = vpop.f32.mrb[0].mxu0
    %v296 = vadd.f32 %v210, %v295
    %v297 = vpop.f32.mrb[0].mxu0
    %v298 = vadd.f32 %v214, %v297
    %299 = vdwg.mxu0
    %300 = vst [vmem:[#allocation2] sm:$0xff] %v290
    %301 = vst [vmem:[#allocation2 + $0x8] sm:$0xff] %v292
    %302 = vst [vmem:[#allocation2 + $0x10] sm:$0xff] %v296
    %303 = vst [vmem:[#allocation2 + $0x18] sm:$0xff] %v298
    %v304 = vld [vmem:[#allocation9] sm:$0xff]
    %v305 = vld [vmem:[#allocation9 + $0x8] sm:$0xff]
    %v306 = vld [vmem:[#allocation9 + $0x10] sm:$0xff]
    %v307 = vld [vmem:[#allocation9 + $0x18] sm:$0xff]
    %v308 = vld [vmem:[#allocation9 + $0x20] sm:$0xff]
    %v309 = vld [vmem:[#allocation9 + $0x28] sm:$0xff]
    %v310 = vld [vmem:[#allocation9 + $0x30] sm:$0xff]
    %v311 = vld [vmem:[#allocation9 + $0x38] sm:$0xff]
    %v312 = vld [vmem:[#allocation9 + $0x40] sm:$0xff]
    %v313 = vld [vmem:[#allocation9 + $0x48] sm:$0xff]
    %v314 = vld [vmem:[#allocation9 + $0x50] sm:$0xff]
    %v315 = vld [vmem:[#allocation9 + $0x58] sm:$0xff]
    %v316 = vld [vmem:[#allocation9 + $0x60] sm:$0xff]
    %v317 = vld [vmem:[#allocation9 + $0x68] sm:$0xff]
    %v318 = vld [vmem:[#allocation9 + $0x70] sm:$0xff]
    %v319 = vld [vmem:[#allocation9 + $0x78] sm:$0xff]
    %vm320 = vcmask 523264
    %v322 = vsel %vm320, 0.0, 0
    %324 = vmatprep.subr.mxu0 %v305
    %325 = vmatpush1.msra.mxu0 %v304
    %326 = vmatprep.subr.mxu0 %v307
    %327 = vmatpush1.msra.mxu0 %v306
    %328 = vmatprep.subr.mxu0 %v309
    %329 = vmatpush1.msra.mxu0 %v308
    %330 = vmatprep.subr.mxu0 %v311
    %331 = vmatpush1.msra.mxu0 %v310
    %332 = vmatprep.subr.mxu0 %v313
    %333 = vmatpush1.msra.mxu0 %v312
    %334 = vmatprep.subr.mxu0 %v315
    %335 = vmatpush1.msra.mxu0 %v314
    %336 = vmatprep.subr.mxu0 %v317
    %337 = vmatpush1.msra.mxu0 %v316
    %338 = vmatprep.subr.mxu0 %v319
    %339 = vmatpush1.msra.mxu0 %v318
    %340 = vmatprep.subr.mxu0 0.0
    %341 = vmatpush1.msra.mxu0 0.0
    %342 = vmatprep.subr.mxu0 0.0
    %343 = vmatpush1.msra.mxu0 0.0
    %344 = vmatprep.subr.mxu0 0.0
    %345 = vmatpush1.msra.mxu0 0.0
    %346 = vmatprep.subr.mxu0 0.0
    %347 = vmatpush1.msra.mxu0 0.0
    %348 = vmatprep.subr.mxu0 0.0
    %349 = vmatpush1.msra.mxu0 0.0
    %350 = vmatprep.subr.mxu0 0.0
    %351 = vmatpush1.msra.mxu0 0.0
    %352 = vmatprep.subr.mxu0 0.0
    %353 = vmatpush1.msra.mxu0 0.0
    %354 = vmatprep.subr.mxu0 0.0
    %355 = vmatpush1.msra.mxu0 0.0
    %356 = vmatprep.subr.mxu0 0.0
    %357 = vmatpush1.msra.mxu0 0.0
    %358 = vmatprep.subr.mxu0 0.0
    %359 = vmatpush1.msra.mxu0 0.0
    %360 = vmatprep.subr.mxu0 0.0
    %361 = vmatpush1.msra.mxu0 0.0
    %362 = vmatprep.subr.mxu0 0.0
    %363 = vmatpush1.msra.mxu0 0.0
    %364 = vmatprep.subr.mxu0 0.0
    %365 = vmatpush1.msra.mxu0 0.0
    %366 = vmatprep.subr.mxu0 0.0
    %367 = vmatpush1.msra.mxu0 0.0
    %368 = vmatprep.subr.mxu0 0.0
    %369 = vmatpush1.msra.mxu0 0.0
    %370 = vmatprep.subr.mxu0 0.0
    %371 = vmatpush1.msra.mxu0 0.0
    %372 = vmatprep.subr.mxu0 0.0
    %373 = vmatpush1.msra.mxu0 0.0
    %374 = vmatprep.subr.mxu0 0.0
    %375 = vmatpush1.msra.mxu0 0.0
    %376 = vmatprep.subr.mxu0 0.0
    %377 = vmatpush1.msra.mxu0 0.0
    %378 = vmatprep.subr.mxu0 0.0
    %379 = vmatpush1.msra.mxu0 0.0
    %380 = vmatprep.subr.mxu0 0.0
    %381 = vmatpush1.msra.mxu0 0.0
    %382 = vmatprep.subr.mxu0 0.0
    %383 = vmatpush1.msra.mxu0 0.0
    %384 = vmatprep.subr.mxu0 0.0
    %385 = vmatpush1.msra.mxu0 0.0
    %386 = vmatprep.subr.mxu0 0.0
    %387 = vmatpush1.msra.mxu0 0.0
    %388 = vmatprep.mubr.f32.mxu0 0.0
    %389 = vmatmul.mubr.f32.gmra.mrb[0].mxu0 %v322
    %v390 = vpop.f32.mrb[0].mxu0
    %v391 = vadd.f32 0.0, %v390
    %v392 = vpop.f32.mrb[0].mxu0
    %v393 = vadd.f32 0.0, %v392
    %394 = vdwg.mxu0
    %v395 = vld [vmem:[#allocation2] sm:$0x3]
    %v396 = vadd.f32 %v395, %v391
    %v397 = vld [vmem:[#allocation2 + $0x18] sm:$0xc0]
    %v399 = vrot.slane %v393, 2
    %v401 = vadd.f32 %v397, %v399
    %v402 = vxor.u32 %v396, 2147483648
    %v403 = vmul.f32 %v402, 1.442695
    %v404 = vpow.pop %v403
    %v405 = vadd.f32 %v404, 1.0
    %v406 = vrcp.pop %v405
    %v407 = vmul.f32 1.0, %v406
    %v408 = vtanh.pop %v396
    %v409 = vmul.f32 %v407, 0.0
    %411 = vrot.lane.b32.xlu0 %v408, 64
    %v412 = vpop.permute.xlu0 %411
    %v414 = vmul.f32 %v407, %v412
    %416 = vrot.lane.b32.xlu0 %v414, 32
    %v417 = vpop.permute.xlu0 %416
    %v419 = vadd.f32 %v409, %v417
    %v420 = vtanh.pop %v419
    %422 = vrot.lane.b32.xlu0 %v420, 64
    %v423 = vpop.permute.xlu0 %422
    %v425 = vmul.f32 %v407, %v423
    %v426 = vxor.u32 %v401, 2147483648
    %v427 = vmul.f32 %v426, 1.442695
    %v428 = vpow.pop %v427
    %v429 = vadd.f32 %v428, 1.0
    %v430 = vrcp.pop %v429
    %v431 = vmul.f32 1.0, %v430
    %v432 = vtanh.pop %v401
    %v433 = vmul.f32 %v431, 0.0
    %435 = vrot.lane.b32.xlu0 %v432, 64
    %v436 = vpop.permute.xlu0 %435
    %v438 = vmul.f32 %v431, %v436
    %440 = vrot.lane.b32.xlu0 %v438, 32
    %v441 = vpop.permute.xlu0 %440
    %v443 = vadd.f32 %v433, %v441
    %v444 = vtanh.pop %v443
    %446 = vrot.lane.b32.xlu0 %v444, 64
    %v447 = vpop.permute.xlu0 %446
    %v449 = vmul.f32 %v431, %v447
    %451 = vrot.lane.b32.xlu0 %v425, 32
    %v452 = vpop.permute.xlu0 %451
    %vm454 = vcmask 254976
    %455 = vst.msk [vmem:[#allocation3] sm:$0x3] %vm454, %v452
    %457 = vrot.lane.b32.xlu0 %v449, 64
    %v458 = vpop.permute.xlu0 %457
    %vm460 = vcmask 523526
    %461 = vst.msk [vmem:[#allocation3 + $0x8] sm:$0xc0] %vm460, %v458
    %v462 = vrot.slane %v449, 6
    %463 = vrot.lane.b32.xlu0 %v462, 64
    %v464 = vpop.permute.xlu0 %463
    %v466 = vsel %vm101, %v452, %v464
    %v467 = vld [vmem:[#allocation9] sm:$0xff]
    %v468 = vld [vmem:[#allocation9 + $0x8] sm:$0xff]
    %v469 = vld [vmem:[#allocation9 + $0x10] sm:$0xff]
    %v470 = vld [vmem:[#allocation9 + $0x18] sm:$0xff]
    %v471 = vld [vmem:[#allocation9 + $0x20] sm:$0xff]
    %v472 = vld [vmem:[#allocation9 + $0x28] sm:$0xff]
    %v473 = vld [vmem:[#allocation9 + $0x30] sm:$0xff]
    %v474 = vld [vmem:[#allocation9 + $0x38] sm:$0xff]
    %v475 = vld [vmem:[#allocation9 + $0x40] sm:$0xff]
    %v476 = vld [vmem:[#allocation9 + $0x48] sm:$0xff]
    %v477 = vld [vmem:[#allocation9 + $0x50] sm:$0xff]
    %v478 = vld [vmem:[#allocation9 + $0x58] sm:$0xff]
    %v479 = vld [vmem:[#allocation9 + $0x60] sm:$0xff]
    %v480 = vld [vmem:[#allocation9 + $0x68] sm:$0xff]
    %v481 = vld [vmem:[#allocation9 + $0x70] sm:$0xff]
    %v482 = vld [vmem:[#allocation9 + $0x78] sm:$0xff]
    %v484 = vsel %vm320, %v466, 0
    %486 = vmatprep.subr.mxu0 %v468
    %487 = vmatpush1.msra.mxu0 %v467
    %488 = vmatprep.subr.mxu0 %v470
    %489 = vmatpush1.msra.mxu0 %v469
    %490 = vmatprep.subr.mxu0 %v472
    %491 = vmatpush1.msra.mxu0 %v471
    %492 = vmatprep.subr.mxu0 %v474
    %493 = vmatpush1.msra.mxu0 %v473
    %494 = vmatprep.subr.mxu0 %v476
    %495 = vmatpush1.msra.mxu0 %v475
    %496 = vmatprep.subr.mxu0 %v478
    %497 = vmatpush1.msra.mxu0 %v477
    %498 = vmatprep.subr.mxu0 %v480
    %499 = vmatpush1.msra.mxu0 %v479
    %500 = vmatprep.subr.mxu0 %v482
    %501 = vmatpush1.msra.mxu0 %v481
    %502 = vmatprep.subr.mxu0 0.0
    %503 = vmatpush1.msra.mxu0 0.0
    %504 = vmatprep.subr.mxu0 0.0
    %505 = vmatpush1.msra.mxu0 0.0
    %506 = vmatprep.subr.mxu0 0.0
    %507 = vmatpush1.msra.mxu0 0.0
    %508 = vmatprep.subr.mxu0 0.0
    %509 = vmatpush1.msra.mxu0 0.0
    %510 = vmatprep.subr.mxu0 0.0
    %511 = vmatpush1.msra.mxu0 0.0
    %512 = vmatprep.subr.mxu0 0.0
    %513 = vmatpush1.msra.mxu0 0.0
    %514 = vmatprep.subr.mxu0 0.0
    %515 = vmatpush1.msra.mxu0 0.0
    %516 = vmatprep.subr.mxu0 0.0
    %517 = vmatpush1.msra.mxu0 0.0
    %518 = vmatprep.subr.mxu0 0.0
    %519 = vmatpush1.msra.mxu0 0.0
    %520 = vmatprep.subr.mxu0 0.0
    %521 = vmatpush1.msra.mxu0 0.0
    %522 = vmatprep.subr.mxu0 0.0
    %523 = vmatpush1.msra.mxu0 0.0
    %524 = vmatprep.subr.mxu0 0.0
    %525 = vmatpush1.msra.mxu0 0.0
    %526 = vmatprep.subr.mxu0 0.0
    %527 = vmatpush1.msra.mxu0 0.0
    %528 = vmatprep.subr.mxu0 0.0
    %529 = vmatpush1.msra.mxu0 0.0
    %530 = vmatprep.subr.mxu0 0.0
    %531 = vmatpush1.msra.mxu0 0.0
    %532 = vmatprep.subr.mxu0 0.0
    %533 = vmatpush1.msra.mxu0 0.0
    %534 = vmatprep.subr.mxu0 0.0
    %535 = vmatpush1.msra.mxu0 0.0
    %536 = vmatprep.subr.mxu0 0.0
    %537 = vmatpush1.msra.mxu0 0.0
    %538 = vmatprep.subr.mxu0 0.0
    %539 = vmatpush1.msra.mxu0 0.0
    %540 = vmatprep.subr.mxu0 0.0
    %541 = vmatpush1.msra.mxu0 0.0
    %542 = vmatprep.subr.mxu0 0.0
    %543 = vmatpush1.msra.mxu0 0.0
    %544 = vmatprep.subr.mxu0 0.0
    %545 = vmatpush1.msra.mxu0 0.0
    %546 = vmatprep.subr.mxu0 0.0
    %547 = vmatpush1.msra.mxu0 0.0
    %548 = vmatprep.subr.mxu0 0.0
    %549 = vmatpush1.msra.mxu0 0.0
    %550 = vmatprep.mubr.f32.mxu0 0.0
    %551 = vmatmul.mubr.f32.gmra.mrb[0].mxu0 %v484
    %v552 = vpop.f32.mrb[0].mxu0
    %v553 = vadd.f32 0.0, %v552
    %v554 = vpop.f32.mrb[0].mxu0
    %v555 = vadd.f32 0.0, %v554
    %556 = vdwg.mxu0
    %v557 = vld [vmem:[#allocation2] sm:$0xc]
    %v559 = vrot.slane %v553, 6
    %v561 = vadd.f32 %v557, %v559
    %v562 = vld [vmem:[#allocation2 + $0x18] sm:$0x30]
    %v564 = vrot.slane %v555, 4
    %v566 = vadd.f32 %v562, %v564
    %v567 = vxor.u32 %v561, 2147483648
    %v568 = vmul.f32 %v567, 1.442695
    %v569 = vpow.pop %v568
    %v570 = vadd.f32 %v569, 1.0
    %v571 = vrcp.pop %v570
    %v572 = vmul.f32 1.0, %v571
    %v573 = vtanh.pop %v561
    %v575 = vrot.slane %v419, 6
    %v577 = vmul.f32 %v572, %v575
    %579 = vrot.lane.b32.xlu0 %v573, 64
    %v580 = vpop.permute.xlu0 %579
    %v582 = vmul.f32 %v572, %v580
    %584 = vrot.lane.b32.xlu0 %v582, 32
    %v585 = vpop.permute.xlu0 %584
    %v587 = vadd.f32 %v577, %v585
    %v588 = vtanh.pop %v587
    %590 = vrot.lane.b32.xlu0 %v588, 64
    %v591 = vpop.permute.xlu0 %590
    %v593 = vmul.f32 %v572, %v591
    %v594 = vxor.u32 %v566, 2147483648
    %v595 = vmul.f32 %v594, 1.442695
    %v596 = vpow.pop %v595
    %v597 = vadd.f32 %v596, 1.0
    %v598 = vrcp.pop %v597
    %v599 = vmul.f32 1.0, %v598
    %v600 = vtanh.pop %v566
    %v602 = vrot.slane %v443, 2
    %v604 = vmul.f32 %v599, %v602
    %606 = vrot.lane.b32.xlu0 %v600, 64
    %v607 = vpop.permute.xlu0 %606
    %v609 = vmul.f32 %v599, %v607
    %611 = vrot.lane.b32.xlu0 %v609, 32
    %v612 = vpop.permute.xlu0 %611
    %v614 = vadd.f32 %v604, %v612
    %v615 = vtanh.pop %v614
    %617 = vrot.lane.b32.xlu0 %v615, 64
    %v618 = vpop.permute.xlu0 %617
    %v620 = vmul.f32 %v599, %v618
    %622 = vrot.lane.b32.xlu0 %v593, 32
    %v623 = vpop.permute.xlu0 %622
    %vm625 = vcmask 257026
    %626 = vst.msk [vmem:[#allocation3] sm:$0xc] %vm625, %v623
    %628 = vrot.lane.b32.xlu0 %v620, 64
    %v629 = vpop.permute.xlu0 %628
    %vm631 = vcmask 521476
    %632 = vst.msk [vmem:[#allocation3 + $0x8] sm:$0x30] %vm631, %v629
    %v633 = vrot.slane %v620, 2
    %634 = vrot.lane.b32.xlu0 %v633, 64
    %v635 = vpop.permute.xlu0 %634
    %v637 = vsel %vm101, %v623, %v635
    %v638 = vld [vmem:[#allocation9] sm:$0xff]
    %v639 = vld [vmem:[#allocation9 + $0x8] sm:$0xff]
    %v640 = vld [vmem:[#allocation9 + $0x10] sm:$0xff]
    %v641 = vld [vmem:[#allocation9 + $0x18] sm:$0xff]
    %v642 = vld [vmem:[#allocation9 + $0x20] sm:$0xff]
    %v643 = vld [vmem:[#allocation9 + $0x28] sm:$0xff]
    %v644 = vld [vmem:[#allocation9 + $0x30] sm:$0xff]
    %v645 = vld [vmem:[#allocation9 + $0x38] sm:$0xff]
    %v646 = vld [vmem:[#allocation9 + $0x40] sm:$0xff]
    %v647 = vld [vmem:[#allocation9 + $0x48] sm:$0xff]
    %v648 = vld [vmem:[#allocation9 + $0x50] sm:$0xff]
    %v649 = vld [vmem:[#allocation9 + $0x58] sm:$0xff]
    %v650 = vld [vmem:[#allocation9 + $0x60] sm:$0xff]
    %v651 = vld [vmem:[#allocation9 + $0x68] sm:$0xff]
    %v652 = vld [vmem:[#allocation9 + $0x70] sm:$0xff]
    %v653 = vld [vmem:[#allocation9 + $0x78] sm:$0xff]
    %v655 = vrot.slane %v637, 2
    %v656 = vsel %vm320, %v655, 0
    %658 = vmatprep.subr.mxu0 %v639
    %659 = vmatpush1.msra.mxu0 %v638
    %660 = vmatprep.subr.mxu0 %v641
    %661 = vmatpush1.msra.mxu0 %v640
    %662 = vmatprep.subr.mxu0 %v643
    %663 = vmatpush1.msra.mxu0 %v642
    %664 = vmatprep.subr.mxu0 %v645
    %665 = vmatpush1.msra.mxu0 %v644
    %666 = vmatprep.subr.mxu0 %v647
    %667 = vmatpush1.msra.mxu0 %v646
    %668 = vmatprep.subr.mxu0 %v649
    %669 = vmatpush1.msra.mxu0 %v648
    %670 = vmatprep.subr.mxu0 %v651
    %671 = vmatpush1.msra.mxu0 %v650
    %672 = vmatprep.subr.mxu0 %v653
    %673 = vmatpush1.msra.mxu0 %v652
    %674 = vmatprep.subr.mxu0 0.0
    %675 = vmatpush1.msra.mxu0 0.0
    %676 = vmatprep.subr.mxu0 0.0
    %677 = vmatpush1.msra.mxu0 0.0
    %678 = vmatprep.subr.mxu0 0.0
    %679 = vmatpush1.msra.mxu0 0.0
    %680 = vmatprep.subr.mxu0 0.0
    %681 = vmatpush1.msra.mxu0 0.0
    %682 = vmatprep.subr.mxu0 0.0
    %683 = vmatpush1.msra.mxu0 0.0
    %684 = vmatprep.subr.mxu0 0.0
    %685 = vmatpush1.msra.mxu0 0.0
    %686 = vmatprep.subr.mxu0 0.0
    %687 = vmatpush1.msra.mxu0 0.0
    %688 = vmatprep.subr.mxu0 0.0
    %689 = vmatpush1.msra.mxu0 0.0
    %690 = vmatprep.subr.mxu0 0.0
    %691 = vmatpush1.msra.mxu0 0.0
    %692 = vmatprep.subr.mxu0 0.0
    %693 = vmatpush1.msra.mxu0 0.0
    %694 = vmatprep.subr.mxu0 0.0
    %695 = vmatpush1.msra.mxu0 0.0
    %696 = vmatprep.subr.mxu0 0.0
    %697 = vmatpush1.msra.mxu0 0.0
    %698 = vmatprep.subr.mxu0 0.0
    %699 = vmatpush1.msra.mxu0 0.0
    %700 = vmatprep.subr.mxu0 0.0
    %701 = vmatpush1.msra.mxu0 0.0
    %702 = vmatprep.subr.mxu0 0.0
    %703 = vmatpush1.msra.mxu0 0.0
    %704 = vmatprep.subr.mxu0 0.0
    %705 = vmatpush1.msra.mxu0 0.0
    %706 = vmatprep.subr.mxu0 0.0
    %707 = vmatpush1.msra.mxu0 0.0
    %708 = vmatprep.subr.mxu0 0.0
    %709 = vmatpush1.msra.mxu0 0.0
    %710 = vmatprep.subr.mxu0 0.0
    %711 = vmatpush1.msra.mxu0 0.0
    %712 = vmatprep.subr.mxu0 0.0
    %713 = vmatpush1.msra.mxu0 0.0
    %714 = vmatprep.subr.mxu0 0.0
    %715 = vmatpush1.msra.mxu0 0.0
    %716 = vmatprep.subr.mxu0 0.0
    %717 = vmatpush1.msra.mxu0 0.0
    %718 = vmatprep.subr.mxu0 0.0
    %719 = vmatpush1.msra.mxu0 0.0
    %720 = vmatprep.subr.mxu0 0.0
    %721 = vmatpush1.msra.mxu0 0.0
    %722 = vmatprep.mubr.f32.mxu0 0.0
    %723 = vmatmul.mubr.f32.gmra.mrb[0].mxu0 %v656
    %v724 = vpop.f32.mrb[0].mxu0
    %v725 = vadd.f32 0.0, %v724
    %v726 = vpop.f32.mrb[0].mxu0
    %v727 = vadd.f32 0.0, %v726
    %728 = vdwg.mxu0
    %v729 = vld [vmem:[#allocation2] sm:$0x30]
    %v731 = vrot.slane %v725, 4
    %v733 = vadd.f32 %v729, %v731
    %v734 = vld [vmem:[#allocation2 + $0x18] sm:$0xc]
    %v736 = vrot.slane %v727, 6
    %v738 = vadd.f32 %v734, %v736
    %v739 = vxor.u32 %v733, 2147483648
    %v740 = vmul.f32 %v739, 1.442695
    %v741 = vpow.pop %v740
    %v742 = vadd.f32 %v741, 1.0
    %v743 = vrcp.pop %v742
    %v744 = vmul.f32 1.0, %v743
    %v745 = vtanh.pop %v733
    %v747 = vrot.slane %v587, 6
    %v749 = vmul.f32 %v744, %v747
    %751 = vrot.lane.b32.xlu0 %v745, 64
    %v752 = vpop.permute.xlu0 %751
    %v754 = vmul.f32 %v744, %v752
    %756 = vrot.lane.b32.xlu0 %v754, 32
    %v757 = vpop.permute.xlu0 %756
    %v759 = vadd.f32 %v749, %v757
    %v760 = vtanh.pop %v759
    %762 = vrot.lane.b32.xlu0 %v760, 64
    %v763 = vpop.permute.xlu0 %762
    %v765 = vmul.f32 %v744, %v763
    %v766 = vxor.u32 %v738, 2147483648
    %v767 = vmul.f32 %v766, 1.442695
    %v768 = vpow.pop %v767
    %v769 = vadd.f32 %v768, 1.0
    %v770 = vrcp.pop %v769
    %v771 = vmul.f32 1.0, %v770
    %v772 = vtanh.pop %v738
    %v774 = vrot.slane %v614, 2
    %v776 = vmul.f32 %v771, %v774
    %778 = vrot.lane.b32.xlu0 %v772, 64
    %v779 = vpop.permute.xlu0 %778
    %v781 = vmul.f32 %v771, %v779
    %783 = vrot.lane.b32.xlu0 %v781, 32
    %v784 = vpop.permute.xlu0 %783
    %v786 = vadd.f32 %v776, %v784
    %v787 = vtanh.pop %v786
    %789 = vrot.lane.b32.xlu0 %v787, 64
    %v790 = vpop.permute.xlu0 %789
    %v792 = vmul.f32 %v771, %v790
    %794 = vrot.lane.b32.xlu0 %v765, 32
    %v795 = vpop.permute.xlu0 %794
    %vm797 = vcmask 259076
    %798 = vst.msk [vmem:[#allocation3] sm:$0x30] %vm797, %v795
    %800 = vrot.lane.b32.xlu0 %v792, 64
    %v801 = vpop.permute.xlu0 %800
    %vm803 = vcmask 519426
    %804 = vst.msk [vmem:[#allocation3 + $0x8] sm:$0xc] %vm803, %v801
    %v805 = vrot.slane %v792, 6
    %806 = vrot.lane.b32.xlu0 %v805, 64
    %v807 = vpop.permute.xlu0 %806
    %v809 = vsel %vm101, %v795, %v807
    %v810 = vld [vmem:[#allocation9] sm:$0xff]
    %v811 = vld [vmem:[#allocation9 + $0x8] sm:$0xff]
    %v812 = vld [vmem:[#allocation9 + $0x10] sm:$0xff]
    %v813 = vld [vmem:[#allocation9 + $0x18] sm:$0xff]
    %v814 = vld [vmem:[#allocation9 + $0x20] sm:$0xff]
    %v815 = vld [vmem:[#allocation9 + $0x28] sm:$0xff]
    %v816 = vld [vmem:[#allocation9 + $0x30] sm:$0xff]
    %v817 = vld [vmem:[#allocation9 + $0x38] sm:$0xff]
    %v818 = vld [vmem:[#allocation9 + $0x40] sm:$0xff]
    %v819 = vld [vmem:[#allocation9 + $0x48] sm:$0xff]
    %v820 = vld [vmem:[#allocation9 + $0x50] sm:$0xff]
    %v821 = vld [vmem:[#allocation9 + $0x58] sm:$0xff]
    %v822 = vld [vmem:[#allocation9 + $0x60] sm:$0xff]
    %v823 = vld [vmem:[#allocation9 + $0x68] sm:$0xff]
    %v824 = vld [vmem:[#allocation9 + $0x70] sm:$0xff]
    %v825 = vld [vmem:[#allocation9 + $0x78] sm:$0xff]
    %v827 = vrot.slane %v809, 4
    %v828 = vsel %vm320, %v827, 0
    %830 = vmatprep.subr.mxu0 %v811
    %831 = vmatpush1.msra.mxu0 %v810
    %832 = vmatprep.subr.mxu0 %v813
    %833 = vmatpush1.msra.mxu0 %v812
    %834 = vmatprep.subr.mxu0 %v815
    %835 = vmatpush1.msra.mxu0 %v814
    %836 = vmatprep.subr.mxu0 %v817
    %837 = vmatpush1.msra.mxu0 %v816
    %838 = vmatprep.subr.mxu0 %v819
    %839 = vmatpush1.msra.mxu0 %v818
    %840 = vmatprep.subr.mxu0 %v821
    %841 = vmatpush1.msra.mxu0 %v820
    %842 = vmatprep.subr.mxu0 %v823
    %843 = vmatpush1.msra.mxu0 %v822
    %844 = vmatprep.subr.mxu0 %v825
    %845 = vmatpush1.msra.mxu0 %v824
    %846 = vmatprep.subr.mxu0 0.0
    %847 = vmatpush1.msra.mxu0 0.0
    %848 = vmatprep.subr.mxu0 0.0
    %849 = vmatpush1.msra.mxu0 0.0
    %850 = vmatprep.subr.mxu0 0.0
    %851 = vmatpush1.msra.mxu0 0.0
    %852 = vmatprep.subr.mxu0 0.0
    %853 = vmatpush1.msra.mxu0 0.0
    %854 = vmatprep.subr.mxu0 0.0
    %855 = vmatpush1.msra.mxu0 0.0
    %856 = vmatprep.subr.mxu0 0.0
    %857 = vmatpush1.msra.mxu0 0.0
    %858 = vmatprep.subr.mxu0 0.0
    %859 = vmatpush1.msra.mxu0 0.0
    %860 = vmatprep.subr.mxu0 0.0
    %861 = vmatpush1.msra.mxu0 0.0
    %862 = vmatprep.subr.mxu0 0.0
    %863 = vmatpush1.msra.mxu0 0.0
    %864 = vmatprep.subr.mxu0 0.0
    %865 = vmatpush1.msra.mxu0 0.0
    %866 = vmatprep.subr.mxu0 0.0
    %867 = vmatpush1.msra.mxu0 0.0
    %868 = vmatprep.subr.mxu0 0.0
    %869 = vmatpush1.msra.mxu0 0.0
    %870 = vmatprep.subr.mxu0 0.0
    %871 = vmatpush1.msra.mxu0 0.0
    %872 = vmatprep.subr.mxu0 0.0
    %873 = vmatpush1.msra.mxu0 0.0
    %874 = vmatprep.subr.mxu0 0.0
    %875 = vmatpush1.msra.mxu0 0.0
    %876 = vmatprep.subr.mxu0 0.0
    %877 = vmatpush1.msra.mxu0 0.0
    %878 = vmatprep.subr.mxu0 0.0
    %879 = vmatpush1.msra.mxu0 0.0
    %880 = vmatprep.subr.mxu0 0.0
    %881 = vmatpush1.msra.mxu0 0.0
    %882 = vmatprep.subr.mxu0 0.0
    %883 = vmatpush1.msra.mxu0 0.0
    %884 = vmatprep.subr.mxu0 0.0
    %885 = vmatpush1.msra.mxu0 0.0
    %886 = vmatprep.subr.mxu0 0.0
    %887 = vmatpush1.msra.mxu0 0.0
    %888 = vmatprep.subr.mxu0 0.0
    %889 = vmatpush1.msra.mxu0 0.0
    %890 = vmatprep.subr.mxu0 0.0
    %891 = vmatpush1.msra.mxu0 0.0
    %892 = vmatprep.subr.mxu0 0.0
    %893 = vmatpush1.msra.mxu0 0.0
    %894 = vmatprep.mubr.f32.mxu0 0.0
    %895 = vmatmul.mubr.f32.gmra.mrb[0].mxu0 %v828
    %v896 = vpop.f32.mrb[0].mxu0
    %v897 = vadd.f32 0.0, %v896
    %v898 = vpop.f32.mrb[0].mxu0
    %v899 = vadd.f32 0.0, %v898
    %900 = vdwg.mxu0
    %v901 = vld [vmem:[#allocation2] sm:$0xc0]
    %v903 = vrot.slane %v897, 2
    %v905 = vadd.f32 %v901, %v903
    %v906 = vld [vmem:[#allocation2 + $0x18] sm:$0x3]
    %v907 = vadd.f32 %v906, %v899
    %v908 = vxor.u32 %v905, 2147483648
    %v909 = vmul.f32 %v908, 1.442695
    %v910 = vpow.pop %v909
    %v911 = vadd.f32 %v910, 1.0
    %v912 = vrcp.pop %v911
    %v913 = vmul.f32 1.0, %v912
    %v914 = vtanh.pop %v905
    %v916 = vrot.slane %v759, 6
    %v918 = vmul.f32 %v913, %v916
    %920 = vrot.lane.b32.xlu0 %v914, 64
    %v921 = vpop.permute.xlu0 %920
    %v923 = vmul.f32 %v913, %v921
    %925 = vrot.lane.b32.xlu0 %v923, 32
    %v926 = vpop.permute.xlu0 %925
    %v928 = vadd.f32 %v918, %v926
    %v929 = vtanh.pop %v928
    %931 = vrot.lane.b32.xlu0 %v929, 64
    %v932 = vpop.permute.xlu0 %931
    %v934 = vmul.f32 %v913, %v932
    %v935 = vxor.u32 %v907, 2147483648
    %v936 = vmul.f32 %v935, 1.442695
    %v937 = vpow.pop %v936
    %v938 = vadd.f32 %v937, 1.0
    %v939 = vrcp.pop %v938
    %v940 = vmul.f32 1.0, %v939
    %v941 = vtanh.pop %v907
    %v943 = vrot.slane %v786, 2
    %v945 = vmul.f32 %v940, %v943
    %947 = vrot.lane.b32.xlu0 %v941, 64
    %v948 = vpop.permute.xlu0 %947
    %v950 = vmul.f32 %v940, %v948
    %952 = vrot.lane.b32.xlu0 %v950, 32
    %v953 = vpop.permute.xlu0 %952
    %v955 = vadd.f32 %v945, %v953
    %v956 = vtanh.pop %v955
    %958 = vrot.lane.b32.xlu0 %v956, 64
    %v959 = vpop.permute.xlu0 %958
    %v961 = vmul.f32 %v940, %v959
    %963 = vrot.lane.b32.xlu0 %v934, 32
    %v964 = vpop.permute.xlu0 %963
    %vm966 = vcmask 261126
    %967 = vst.msk [vmem:[#allocation3] sm:$0xc0] %vm966, %v964
    %969 = vrot.lane.b32.xlu0 %v961, 64
    %v970 = vpop.permute.xlu0 %969
    %vm972 = vcmask 517376
    %973 = vst.msk [vmem:[#allocation3 + $0x8] sm:$0x3] %vm972, %v970
    %v974 = vrot.slane %v961, 2
    %975 = vrot.lane.b32.xlu0 %v974, 64
    %v976 = vpop.permute.xlu0 %975
    %v978 = vsel %vm101, %v964, %v976
    %v979 = vld [vmem:[#allocation9] sm:$0xff]
    %v980 = vld [vmem:[#allocation9 + $0x8] sm:$0xff]
    %v981 = vld [vmem:[#allocation9 + $0x10] sm:$0xff]
    %v982 = vld [vmem:[#allocation9 + $0x18] sm:$0xff]
    %v983 = vld [vmem:[#allocation9 + $0x20] sm:$0xff]
    %v984 = vld [vmem:[#allocation9 + $0x28] sm:$0xff]
    %v985 = vld [vmem:[#allocation9 + $0x30] sm:$0xff]
    %v986 = vld [vmem:[#allocation9 + $0x38] sm:$0xff]
    %v987 = vld [vmem:[#allocation9 + $0x40] sm:$0xff]
    %v988 = vld [vmem:[#allocation9 + $0x48] sm:$0xff]
    %v989 = vld [vmem:[#allocation9 + $0x50] sm:$0xff]
    %v990 = vld [vmem:[#allocation9 + $0x58] sm:$0xff]
    %v991 = vld [vmem:[#allocation9 + $0x60] sm:$0xff]
    %v992 = vld [vmem:[#allocation9 + $0x68] sm:$0xff]
    %v993 = vld [vmem:[#allocation9 + $0x70] sm:$0xff]
    %v994 = vld [vmem:[#allocation9 + $0x78] sm:$0xff]
    %v996 = vrot.slane %v978, 6
    %v997 = vsel %vm320, %v996, 0
    %999 = vmatprep.subr.mxu0 %v980
    %1000 = vmatpush1.msra.mxu0 %v979
    %1001 = vmatprep.subr.mxu0 %v982
    %1002 = vmatpush1.msra.mxu0 %v981
    %1003 = vmatprep.subr.mxu0 %v984
    %1004 = vmatpush1.msra.mxu0 %v983
    %1005 = vmatprep.subr.mxu0 %v986
    %1006 = vmatpush1.msra.mxu0 %v985
    %1007 = vmatprep.subr.mxu0 %v988
    %1008 = vmatpush1.msra.mxu0 %v987
    %1009 = vmatprep.subr.mxu0 %v990
    %1010 = vmatpush1.msra.mxu0 %v989
    %1011 = vmatprep.subr.mxu0 %v992
    %1012 = vmatpush1.msra.mxu0 %v991
    %1013 = vmatprep.subr.mxu0 %v994
    %1014 = vmatpush1.msra.mxu0 %v993
    %1015 = vmatprep.subr.mxu0 0.0
    %1016 = vmatpush1.msra.mxu0 0.0
    %1017 = vmatprep.subr.mxu0 0.0
    %1018 = vmatpush1.msra.mxu0 0.0
    %1019 = vmatprep.subr.mxu0 0.0
    %1020 = vmatpush1.msra.mxu0 0.0
    %1021 = vmatprep.subr.mxu0 0.0
    %1022 = vmatpush1.msra.mxu0 0.0
    %1023 = vmatprep.subr.mxu0 0.0
    %1024 = vmatpush1.msra.mxu0 0.0
    %1025 = vmatprep.subr.mxu0 0.0
    %1026 = vmatpush1.msra.mxu0 0.0
    %1027 = vmatprep.subr.mxu0 0.0
    %1028 = vmatpush1.msra.mxu0 0.0
    %1029 = vmatprep.subr.mxu0 0.0
    %1030 = vmatpush1.msra.mxu0 0.0
    %1031 = vmatprep.subr.mxu0 0.0
    %1032 = vmatpush1.msra.mxu0 0.0
    %1033 = vmatprep.subr.mxu0 0.0
    %1034 = vmatpush1.msra.mxu0 0.0
    %1035 = vmatprep.subr.mxu0 0.0
    %1036 = vmatpush1.msra.mxu0 0.0
    %1037 = vmatprep.subr.mxu0 0.0
    %1038 = vmatpush1.msra.mxu0 0.0
    %1039 = vmatprep.subr.mxu0 0.0
    %1040 = vmatpush1.msra.mxu0 0.0
    %1041 = vmatprep.subr.mxu0 0.0
    %1042 = vmatpush1.msra.mxu0 0.0
    %1043 = vmatprep.subr.mxu0 0.0
    %1044 = vmatpush1.msra.mxu0 0.0
    %1045 = vmatprep.subr.mxu0 0.0
    %1046 = vmatpush1.msra.mxu0 0.0
    %1047 = vmatprep.subr.mxu0 0.0
    %1048 = vmatpush1.msra.mxu0 0.0
    %1049 = vmatprep.subr.mxu0 0.0
    %1050 = vmatpush1.msra.mxu0 0.0
    %1051 = vmatprep.subr.mxu0 0.0
    %1052 = vmatpush1.msra.mxu0 0.0
    %1053 = vmatprep.subr.mxu0 0.0
    %1054 = vmatpush1.msra.mxu0 0.0
    %1055 = vmatprep.subr.mxu0 0.0
    %1056 = vmatpush1.msra.mxu0 0.0
    %1057 = vmatprep.subr.mxu0 0.0
    %1058 = vmatpush1.msra.mxu0 0.0
    %1059 = vmatprep.subr.mxu0 0.0
    %1060 = vmatpush1.msra.mxu0 0.0
    %1061 = vmatprep.subr.mxu0 0.0
    %1062 = vmatpush1.msra.mxu0 0.0
    %1063 = vmatprep.mubr.f32.mxu0 0.0
    %1064 = vmatmul.mubr.f32.gmra.mrb[0].mxu0 %v997
    %v1065 = vpop.f32.mrb[0].mxu0
    %v1066 = vadd.f32 0.0, %v1065
    %v1067 = vpop.f32.mrb[0].mxu0
    %v1068 = vadd.f32 0.0, %v1067
    %1069 = vdwg.mxu0
    %v1070 = vld [vmem:[#allocation2 + $0x10] sm:$0x3]
    %v1071 = vadd.f32 %v1070, %v1066
    %v1072 = vld [vmem:[#allocation2 + $0x8] sm:$0xc0]
    %v1074 = vrot.slane %v1068, 2
    %v1076 = vadd.f32 %v1072, %v1074
    %v1077 = vxor.u32 %v1071, 2147483648
    %v1078 = vmul.f32 %v1077, 1.442695
    %v1079 = vpow.pop %v1078
    %v1080 = vadd.f32 %v1079, 1.0
    %v1081 = vrcp.pop %v1080
    %v1082 = vmul.f32 1.0, %v1081
    %v1083 = vtanh.pop %v1071
    %v1085 = vrot.slane %v928, 6
    %v1087 = vmul.f32 %v1082, %v1085
    %1089 = vrot.lane.b32.xlu0 %v1083, 64
    %v1090 = vpop.permute.xlu0 %1089
    %v1092 = vmul.f32 %v1082, %v1090
    %1094 = vrot.lane.b32.xlu0 %v1092, 32
    %v1095 = vpop.permute.xlu0 %1094
    %v1097 = vadd.f32 %v1087, %v1095
    %v1098 = vtanh.pop %v1097
    %1100 = vrot.lane.b32.xlu0 %v1098, 64
    %v1101 = vpop.permute.xlu0 %1100
    %v1103 = vmul.f32 %v1082, %v1101
    %v1104 = vxor.u32 %v1076, 2147483648
    %v1105 = vmul.f32 %v1104, 1.442695
    %v1106 = vpow.pop %v1105
    %v1107 = vadd.f32 %v1106, 1.0
    %v1108 = vrcp.pop %v1107
    %v1109 = vmul.f32 1.0, %v1108
    %v1110 = vtanh.pop %v1076
    %v1112 = vrot.slane %v955, 2
    %v1114 = vmul.f32 %v1109, %v1112
    %1116 = vrot.lane.b32.xlu0 %v1110, 64
    %v1117 = vpop.permute.xlu0 %1116
    %v1119 = vmul.f32 %v1109, %v1117
    %1121 = vrot.lane.b32.xlu0 %v1119, 32
    %v1122 = vpop.permute.xlu0 %1121
    %v1124 = vadd.f32 %v1114, %v1122
    %v1125 = vtanh.pop %v1124
    %1127 = vrot.lane.b32.xlu0 %v1125, 64
    %v1128 = vpop.permute.xlu0 %1127
    %v1130 = vmul.f32 %v1109, %v1128
    %1132 = vrot.lane.b32.xlu0 %v1103, 32
    %v1133 = vpop.permute.xlu0 %1132
    %1135 = vst.msk [vmem:[#allocation3 + $0x8] sm:$0x3] %vm454, %v1133
    %1137 = vrot.lane.b32.xlu0 %v1130, 64
    %v1138 = vpop.permute.xlu0 %1137
    %1140 = vst.msk [vmem:[#allocation3] sm:$0xc0] %vm460, %v1138
    %v1141 = vrot.slane %v1130, 6
    %1142 = vrot.lane.b32.xlu0 %v1141, 64
    %v1143 = vpop.permute.xlu0 %1142
    %v1145 = vsel %vm101, %v1133, %v1143
    %v1146 = vld [vmem:[#allocation9] sm:$0xff]
    %v1147 = vld [vmem:[#allocation9 + $0x8] sm:$0xff]
    %v1148 = vld [vmem:[#allocation9 + $0x10] sm:$0xff]
    %v1149 = vld [vmem:[#allocation9 + $0x18] sm:$0xff]
    %v1150 = vld [vmem:[#allocation9 + $0x20] sm:$0xff]
    %v1151 = vld [vmem:[#allocation9 + $0x28] sm:$0xff]
    %v1152 = vld [vmem:[#allocation9 + $0x30] sm:$0xff]
    %v1153 = vld [vmem:[#allocation9 + $0x38] sm:$0xff]
    %v1154 = vld [vmem:[#allocation9 + $0x40] sm:$0xff]
    %v1155 = vld [vmem:[#allocation9 + $0x48] sm:$0xff]
    %v1156 = vld [vmem:[#allocation9 + $0x50] sm:$0xff]
    %v1157 = vld [vmem:[#allocation9 + $0x58] sm:$0xff]
    %v1158 = vld [vmem:[#allocation9 + $0x60] sm:$0xff]
    %v1159 = vld [vmem:[#allocation9 + $0x68] sm:$0xff]
    %v1160 = vld [vmem:[#allocation9 + $0x70] sm:$0xff]
    %v1161 = vld [vmem:[#allocation9 + $0x78] sm:$0xff]
    %v1163 = vsel %vm320, %v1145, 0
    %1165 = vmatprep.subr.mxu0 %v1147
    %1166 = vmatpush1.msra.mxu0 %v1146
    %1167 = vmatprep.subr.mxu0 %v1149
    %1168 = vmatpush1.msra.mxu0 %v1148
    %1169 = vmatprep.subr.mxu0 %v1151
    %1170 = vmatpush1.msra.mxu0 %v1150
    %1171 = vmatprep.subr.mxu0 %v1153
    %1172 = vmatpush1.msra.mxu0 %v1152
    %1173 = vmatprep.subr.mxu0 %v1155
    %1174 = vmatpush1.msra.mxu0 %v1154
    %1175 = vmatprep.subr.mxu0 %v1157
    %1176 = vmatpush1.msra.mxu0 %v1156
    %1177 = vmatprep.subr.mxu0 %v1159
    %1178 = vmatpush1.msra.mxu0 %v1158
    %1179 = vmatprep.subr.mxu0 %v1161
    %1180 = vmatpush1.msra.mxu0 %v1160
    %1181 = vmatprep.subr.mxu0 0.0
    %1182 = vmatpush1.msra.mxu0 0.0
    %1183 = vmatprep.subr.mxu0 0.0
    %1184 = vmatpush1.msra.mxu0 0.0
    %1185 = vmatprep.subr.mxu0 0.0
    %1186 = vmatpush1.msra.mxu0 0.0
    %1187 = vmatprep.subr.mxu0 0.0
    %1188 = vmatpush1.msra.mxu0 0.0
    %1189 = vmatprep.subr.mxu0 0.0
    %1190 = vmatpush1.msra.mxu0 0.0
    %1191 = vmatprep.subr.mxu0 0.0
    %1192 = vmatpush1.msra.mxu0 0.0
    %1193 = vmatprep.subr.mxu0 0.0
    %1194 = vmatpush1.msra.mxu0 0.0
    %1195 = vmatprep.subr.mxu0 0.0
    %1196 = vmatpush1.msra.mxu0 0.0
    %1197 = vmatprep.subr.mxu0 0.0
    %1198 = vmatpush1.msra.mxu0 0.0
    %1199 = vmatprep.subr.mxu0 0.0
    %1200 = vmatpush1.msra.mxu0 0.0
    %1201 = vmatprep.subr.mxu0 0.0
    %1202 = vmatpush1.msra.mxu0 0.0
    %1203 = vmatprep.subr.mxu0 0.0
    %1204 = vmatpush1.msra.mxu0 0.0
    %1205 = vmatprep.subr.mxu0 0.0
    %1206 = vmatpush1.msra.mxu0 0.0
    %1207 = vmatprep.subr.mxu0 0.0
    %1208 = vmatpush1.msra.mxu0 0.0
    %1209 = vmatprep.subr.mxu0 0.0
    %1210 = vmatpush1.msra.mxu0 0.0
    %1211 = vmatprep.subr.mxu0 0.0
    %1212 = vmatpush1.msra.mxu0 0.0
    %1213 = vmatprep.subr.mxu0 0.0
    %1214 = vmatpush1.msra.mxu0 0.0
    %1215 = vmatprep.subr.mxu0 0.0
    %1216 = vmatpush1.msra.mxu0 0.0
    %1217 = vmatprep.subr.mxu0 0.0
    %1218 = vmatpush1.msra.mxu0 0.0
    %1219 = vmatprep.subr.mxu0 0.0
    %1220 = vmatpush1.msra.mxu0 0.0
    %1221 = vmatprep.subr.mxu0 0.0
    %1222 = vmatpush1.msra.mxu0 0.0
    %1223 = vmatprep.subr.mxu0 0.0
    %1224 = vmatpush1.msra.mxu0 0.0
    %1225 = vmatprep.subr.mxu0 0.0
    %1226 = vmatpush1.msra.mxu0 0.0
    %1227 = vmatprep.subr.mxu0 0.0
    %1228 = vmatpush1.msra.mxu0 0.0
    %1229 = vmatprep.mubr.f32.mxu0 0.0
    %1230 = vmatmul.mubr.f32.gmra.mrb[0].mxu0 %v1163
    %v1231 = vpop.f32.mrb[0].mxu0
    %v1232 = vadd.f32 0.0, %v1231
    %v1233 = vpop.f32.mrb[0].mxu0
    %v1234 = vadd.f32 0.0, %v1233
    %1235 = vdwg.mxu0
    %v1236 = vld [vmem:[#allocation2 + $0x10] sm:$0xc]
    %v1238 = vrot.slane %v1232, 6
    %v1240 = vadd.f32 %v1236, %v1238
    %v1241 = vld [vmem:[#allocation2 + $0x8] sm:$0x30]
    %v1243 = vrot.slane %v1234, 4
    %v1245 = vadd.f32 %v1241, %v1243
    %v1246 = vxor.u32 %v1240, 2147483648
    %v1247 = vmul.f32 %v1246, 1.442695
    %v1248 = vpow.pop %v1247
    %v1249 = vadd.f32 %v1248, 1.0
    %v1250 = vrcp.pop %v1249
    %v1251 = vmul.f32 1.0, %v1250
    %v1252 = vtanh.pop %v1240
    %v1254 = vrot.slane %v1097, 6
    %v1256 = vmul.f32 %v1251, %v1254
    %1258 = vrot.lane.b32.xlu0 %v1252, 64
    %v1259 = vpop.permute.xlu0 %1258
    %v1261 = vmul.f32 %v1251, %v1259
    %1263 = vrot.lane.b32.xlu0 %v1261, 32
    %v1264 = vpop.permute.xlu0 %1263
    %v1266 = vadd.f32 %v1256, %v1264
    %v1267 = vtanh.pop %v1266
    %1269 = vrot.lane.b32.xlu0 %v1267, 64
    %v1270 = vpop.permute.xlu0 %1269
    %v1272 = vmul.f32 %v1251, %v1270
    %v1273 = vxor.u32 %v1245, 2147483648
    %v1274 = vmul.f32 %v1273, 1.442695
    %v1275 = vpow.pop %v1274
    %v1276 = vadd.f32 %v1275, 1.0
    %v1277 = vrcp.pop %v1276
    %v1278 = vmul.f32 1.0, %v1277
    %v1279 = vtanh.pop %v1245
    %v1281 = vrot.slane %v1124, 2
    %v1283 = vmul.f32 %v1278, %v1281
    %1285 = vrot.lane.b32.xlu0 %v1279, 64
    %v1286 = vpop.permute.xlu0 %1285
    %v1288 = vmul.f32 %v1278, %v1286
    %1290 = vrot.lane.b32.xlu0 %v1288, 32
    %v1291 = vpop.permute.xlu0 %1290
    %v1293 = vadd.f32 %v1283, %v1291
    %v1294 = vtanh.pop %v1293
    %1296 = vrot.lane.b32.xlu0 %v1294, 64
    %v1297 = vpop.permute.xlu0 %1296
    %v1299 = vmul.f32 %v1278, %v1297
    %1301 = vrot.lane.b32.xlu0 %v1272, 32
    %v1302 = vpop.permute.xlu0 %1301
    %1304 = vst.msk [vmem:[#allocation3 + $0x8] sm:$0xc] %vm625, %v1302
    %1306 = vrot.lane.b32.xlu0 %v1299, 64
    %v1307 = vpop.permute.xlu0 %1306
    %1309 = vst.msk [vmem:[#allocation3] sm:$0x30] %vm631, %v1307
    %v1310 = vrot.slane %v1299, 2
    %1311 = vrot.lane.b32.xlu0 %v1310, 64
    %v1312 = vpop.permute.xlu0 %1311
    %v1314 = vsel %vm101, %v1302, %v1312
    %v1315 = vld [vmem:[#allocation9] sm:$0xff]
    %v1316 = vld [vmem:[#allocation9 + $0x8] sm:$0xff]
    %v1317 = vld [vmem:[#allocation9 + $0x10] sm:$0xff]
    %v1318 = vld [vmem:[#allocation9 + $0x18] sm:$0xff]
    %v1319 = vld [vmem:[#allocation9 + $0x20] sm:$0xff]
    %v1320 = vld [vmem:[#allocation9 + $0x28] sm:$0xff]
    %v1321 = vld [vmem:[#allocation9 + $0x30] sm:$0xff]
    %v1322 = vld [vmem:[#allocation9 + $0x38] sm:$0xff]
    %v1323 = vld [vmem:[#allocation9 + $0x40] sm:$0xff]
    %v1324 = vld [vmem:[#allocation9 + $0x48] sm:$0xff]
    %v1325 = vld [vmem:[#allocation9 + $0x50] sm:$0xff]
    %v1326 = vld [vmem:[#allocation9 + $0x58] sm:$0xff]
    %v1327 = vld [vmem:[#allocation9 + $0x60] sm:$0xff]
    %v1328 = vld [vmem:[#allocation9 + $0x68] sm:$0xff]
    %v1329 = vld [vmem:[#allocation9 + $0x70] sm:$0xff]
    %v1330 = vld [vmem:[#allocation9 + $0x78] sm:$0xff]
    %v1332 = vrot.slane %v1314, 2
    %v1333 = vsel %vm320, %v1332, 0
    %1335 = vmatprep.subr.mxu0 %v1316
    %1336 = vmatpush1.msra.mxu0 %v1315
    %1337 = vmatprep.subr.mxu0 %v1318
    %1338 = vmatpush1.msra.mxu0 %v1317
    %1339 = vmatprep.subr.mxu0 %v1320
    %1340 = vmatpush1.msra.mxu0 %v1319
    %1341 = vmatprep.subr.mxu0 %v1322
    %1342 = vmatpush1.msra.mxu0 %v1321
    %1343 = vmatprep.subr.mxu0 %v1324
    %1344 = vmatpush1.msra.mxu0 %v1323
    %1345 = vmatprep.subr.mxu0 %v1326
    %1346 = vmatpush1.msra.mxu0 %v1325
    %1347 = vmatprep.subr.mxu0 %v1328
    %1348 = vmatpush1.msra.mxu0 %v1327
    %1349 = vmatprep.subr.mxu0 %v1330
    %1350 = vmatpush1.msra.mxu0 %v1329
    %1351 = vmatprep.subr.mxu0 0.0
    %1352 = vmatpush1.msra.mxu0 0.0
    %1353 = vmatprep.subr.mxu0 0.0
    %1354 = vmatpush1.msra.mxu0 0.0
    %1355 = vmatprep.subr.mxu0 0.0
    %1356 = vmatpush1.msra.mxu0 0.0
    %1357 = vmatprep.subr.mxu0 0.0
    %1358 = vmatpush1.msra.mxu0 0.0
    %1359 = vmatprep.subr.mxu0 0.0
    %1360 = vmatpush1.msra.mxu0 0.0
    %1361 = vmatprep.subr.mxu0 0.0
    %1362 = vmatpush1.msra.mxu0 0.0
    %1363 = vmatprep.subr.mxu0 0.0
    %1364 = vmatpush1.msra.mxu0 0.0
    %1365 = vmatprep.subr.mxu0 0.0
    %1366 = vmatpush1.msra.mxu0 0.0
    %1367 = vmatprep.subr.mxu0 0.0
    %1368 = vmatpush1.msra.mxu0 0.0
    %1369 = vmatprep.subr.mxu0 0.0
    %1370 = vmatpush1.msra.mxu0 0.0
    %1371 = vmatprep.subr.mxu0 0.0
    %1372 = vmatpush1.msra.mxu0 0.0
    %1373 = vmatprep.subr.mxu0 0.0
    %1374 = vmatpush1.msra.mxu0 0.0
    %1375 = vmatprep.subr.mxu0 0.0
    %1376 = vmatpush1.msra.mxu0 0.0
    %1377 = vmatprep.subr.mxu0 0.0
    %1378 = vmatpush1.msra.mxu0 0.0
    %1379 = vmatprep.subr.mxu0 0.0
    %1380 = vmatpush1.msra.mxu0 0.0
    %1381 = vmatprep.subr.mxu0 0.0
    %1382 = vmatpush1.msra.mxu0 0.0
    %1383 = vmatprep.subr.mxu0 0.0
    %1384 = vmatpush1.msra.mxu0 0.0
    %1385 = vmatprep.subr.mxu0 0.0
    %1386 = vmatpush1.msra.mxu0 0.0
    %1387 = vmatprep.subr.mxu0 0.0
    %1388 = vmatpush1.msra.mxu0 0.0
    %1389 = vmatprep.subr.mxu0 0.0
    %1390 = vmatpush1.msra.mxu0 0.0
    %1391 = vmatprep.subr.mxu0 0.0
    %1392 = vmatpush1.msra.mxu0 0.0
    %1393 = vmatprep.subr.mxu0 0.0
    %1394 = vmatpush1.msra.mxu0 0.0
    %1395 = vmatprep.subr.mxu0 0.0
    %1396 = vmatpush1.msra.mxu0 0.0
    %1397 = vmatprep.subr.mxu0 0.0
    %1398 = vmatpush1.msra.mxu0 0.0
    %1399 = vmatprep.mubr.f32.mxu0 0.0
    %1400 = vmatmul.mubr.f32.gmra.mrb[0].mxu0 %v1333
    %v1401 = vpop.f32.mrb[0].mxu0
    %v1402 = vadd.f32 0.0, %v1401
    %v1403 = vpop.f32.mrb[0].mxu0
    %v1404 = vadd.f32 0.0, %v1403
    %1405 = vdwg.mxu0
    %v1406 = vld [vmem:[#allocation2 + $0x10] sm:$0x30]
    %v1408 = vrot.slane %v1402, 4
    %v1410 = vadd.f32 %v1406, %v1408
    %v1411 = vld [vmem:[#allocation2 + $0x8] sm:$0xc]
    %v1413 = vrot.slane %v1404, 6
    %v1415 = vadd.f32 %v1411, %v1413
    %v1416 = vxor.u32 %v1410, 2147483648
    %v1417 = vmul.f32 %v1416, 1.442695
    %v1418 = vpow.pop %v1417
    %v1419 = vadd.f32 %v1418, 1.0
    %v1420 = vrcp.pop %v1419
    %v1421 = vmul.f32 1.0, %v1420
    %v1422 = vtanh.pop %v1410
    %v1424 = vrot.slane %v1266, 6
    %v1426 = vmul.f32 %v1421, %v1424
    %1428 = vrot.lane.b32.xlu0 %v1422, 64
    %v1429 = vpop.permute.xlu0 %1428
    %v1431 = vmul.f32 %v1421, %v1429
    %1433 = vrot.lane.b32.xlu0 %v1431, 32
    %v1434 = vpop.permute.xlu0 %1433
    %v1436 = vadd.f32 %v1426, %v1434
    %v1437 = vtanh.pop %v1436
    %1439 = vrot.lane.b32.xlu0 %v1437, 64
    %v1440 = vpop.permute.xlu0 %1439
    %v1442 = vmul.f32 %v1421, %v1440
    %v1443 = vxor.u32 %v1415, 2147483648
    %v1444 = vmul.f32 %v1443, 1.442695
    %v1445 = vpow.pop %v1444
    %v1446 = vadd.f32 %v1445, 1.0
    %v1447 = vrcp.pop %v1446
    %v1448 = vmul.f32 1.0, %v1447
    %v1449 = vtanh.pop %v1415
    %v1451 = vrot.slane %v1293, 2
    %v1453 = vmul.f32 %v1448, %v1451
    %1455 = vrot.lane.b32.xlu0 %v1449, 64
    %v1456 = vpop.permute.xlu0 %1455
    %v1458 = vmul.f32 %v1448, %v1456
    %1460 = vrot.lane.b32.xlu0 %v1458, 32
    %v1461 = vpop.permute.xlu0 %1460
    %v1463 = vadd.f32 %v1453, %v1461
    %v1464 = vtanh.pop %v1463
    %1466 = vrot.lane.b32.xlu0 %v1464, 64
    %v1467 = vpop.permute.xlu0 %1466
    %v1469 = vmul.f32 %v1448, %v1467
    %1471 = vrot.lane.b32.xlu0 %v1442, 32
    %v1472 = vpop.permute.xlu0 %1471
    %1474 = vst.msk [vmem:[#allocation3 + $0x8] sm:$0x30] %vm797, %v1472
    %1476 = vrot.lane.b32.xlu0 %v1469, 64
    %v1477 = vpop.permute.xlu0 %1476
    %1479 = vst.msk [vmem:[#allocation3] sm:$0xc] %vm803, %v1477
    %v1480 = vrot.slane %v1469, 6
    %1481 = vrot.lane.b32.xlu0 %v1480, 64
    %v1482 = vpop.permute.xlu0 %1481
    %v1484 = vsel %vm101, %v1472, %v1482
    %v1485 = vld [vmem:[#allocation9] sm:$0xff]
    %v1486 = vld [vmem:[#allocation9 + $0x8] sm:$0xff]
    %v1487 = vld [vmem:[#allocation9 + $0x10] sm:$0xff]
    %v1488 = vld [vmem:[#allocation9 + $0x18] sm:$0xff]
    %v1489 = vld [vmem:[#allocation9 + $0x20] sm:$0xff]
    %v1490 = vld [vmem:[#allocation9 + $0x28] sm:$0xff]
    %v1491 = vld [vmem:[#allocation9 + $0x30] sm:$0xff]
    %v1492 = vld [vmem:[#allocation9 + $0x38] sm:$0xff]
    %v1493 = vld [vmem:[#allocation9 + $0x40] sm:$0xff]
    %v1494 = vld [vmem:[#allocation9 + $0x48] sm:$0xff]
    %v1495 = vld [vmem:[#allocation9 + $0x50] sm:$0xff]
    %v1496 = vld [vmem:[#allocation9 + $0x58] sm:$0xff]
    %v1497 = vld [vmem:[#allocation9 + $0x60] sm:$0xff]
    %v1498 = vld [vmem:[#allocation9 + $0x68] sm:$0xff]
    %v1499 = vld [vmem:[#allocation9 + $0x70] sm:$0xff]
    %v1500 = vld [vmem:[#allocation9 + $0x78] sm:$0xff]
    %v1502 = vrot.slane %v1484, 4
    %v1503 = vsel %vm320, %v1502, 0
    %1505 = vmatprep.subr.mxu0 %v1486
    %1506 = vmatpush1.msra.mxu0 %v1485
    %1507 = vmatprep.subr.mxu0 %v1488
    %1508 = vmatpush1.msra.mxu0 %v1487
    %1509 = vmatprep.subr.mxu0 %v1490
    %1510 = vmatpush1.msra.mxu0 %v1489
    %1511 = vmatprep.subr.mxu0 %v1492
    %1512 = vmatpush1.msra.mxu0 %v1491
    %1513 = vmatprep.subr.mxu0 %v1494
    %1514 = vmatpush1.msra.mxu0 %v1493
    %1515 = vmatprep.subr.mxu0 %v1496
    %1516 = vmatpush1.msra.mxu0 %v1495
    %1517 = vmatprep.subr.mxu0 %v1498
    %1518 = vmatpush1.msra.mxu0 %v1497
    %1519 = vmatprep.subr.mxu0 %v1500
    %1520 = vmatpush1.msra.mxu0 %v1499
    %1521 = vmatprep.subr.mxu0 0.0
    %1522 = vmatpush1.msra.mxu0 0.0
    %1523 = vmatprep.subr.mxu0 0.0
    %1524 = vmatpush1.msra.mxu0 0.0
    %1525 = vmatprep.subr.mxu0 0.0
    %1526 = vmatpush1.msra.mxu0 0.0
    %1527 = vmatprep.subr.mxu0 0.0
    %1528 = vmatpush1.msra.mxu0 0.0
    %1529 = vmatprep.subr.mxu0 0.0
    %1530 = vmatpush1.msra.mxu0 0.0
    %1531 = vmatprep.subr.mxu0 0.0
    %1532 = vmatpush1.msra.mxu0 0.0
    %1533 = vmatprep.subr.mxu0 0.0
    %1534 = vmatpush1.msra.mxu0 0.0
    %1535 = vmatprep.subr.mxu0 0.0
    %1536 = vmatpush1.msra.mxu0 0.0
    %1537 = vmatprep.subr.mxu0 0.0
    %1538 = vmatpush1.msra.mxu0 0.0
    %1539 = vmatprep.subr.mxu0 0.0
    %1540 = vmatpush1.msra.mxu0 0.0
    %1541 = vmatprep.subr.mxu0 0.0
    %1542 = vmatpush1.msra.mxu0 0.0
    %1543 = vmatprep.subr.mxu0 0.0
    %1544 = vmatpush1.msra.mxu0 0.0
    %1545 = vmatprep.subr.mxu0 0.0
    %1546 = vmatpush1.msra.mxu0 0.0
    %1547 = vmatprep.subr.mxu0 0.0
    %1548 = vmatpush1.msra.mxu0 0.0
    %1549 = vmatprep.subr.mxu0 0.0
    %1550 = vmatpush1.msra.mxu0 0.0
    %1551 = vmatprep.subr.mxu0 0.0
    %1552 = vmatpush1.msra.mxu0 0.0
    %1553 = vmatprep.subr.mxu0 0.0
    %1554 = vmatpush1.msra.mxu0 0.0
    %1555 = vmatprep.subr.mxu0 0.0
    %1556 = vmatpush1.msra.mxu0 0.0
    %1557 = vmatprep.subr.mxu0 0.0
    %1558 = vmatpush1.msra.mxu0 0.0
    %1559 = vmatprep.subr.mxu0 0.0
    %1560 = vmatpush1.msra.mxu0 0.0
    %1561 = vmatprep.subr.mxu0 0.0
    %1562 = vmatpush1.msra.mxu0 0.0
    %1563 = vmatprep.subr.mxu0 0.0
    %1564 = vmatpush1.msra.mxu0 0.0
    %1565 = vmatprep.subr.mxu0 0.0
    %1566 = vmatpush1.msra.mxu0 0.0
    %1567 = vmatprep.subr.mxu0 0.0
    %1568 = vmatpush1.msra.mxu0 0.0
    %1569 = vmatprep.mubr.f32.mxu0 0.0
    %1570 = vmatmul.mubr.f32.gmra.mrb[0].mxu0 %v1503
    %v1571 = vpop.f32.mrb[0].mxu0
    %v1572 = vadd.f32 0.0, %v1571
    %v1573 = vpop.f32.mrb[0].mxu0
    %v1574 = vadd.f32 0.0, %v1573
    %1575 = vdwg.mxu0
    %v1576 = vld [vmem:[#allocation2 + $0x10] sm:$0xc0]
    %v1578 = vrot.slane %v1572, 2
    %v1580 = vadd.f32 %v1576, %v1578
    %v1581 = vld [vmem:[#allocation2 + $0x8] sm:$0x3]
    %v1582 = vadd.f32 %v1581, %v1574
    %v1583 = vxor.u32 %v1580, 2147483648
    %v1584 = vmul.f32 %v1583, 1.442695
    %v1585 = vpow.pop %v1584
    %v1586 = vadd.f32 %v1585, 1.0
    %v1587 = vrcp.pop %v1586
    %v1588 = vmul.f32 1.0, %v1587
    %v1589 = vtanh.pop %v1580
    %v1591 = vrot.slane %v1436, 6
    %v1593 = vmul.f32 %v1588, %v1591
    %1595 = vrot.lane.b32.xlu0 %v1589, 64
    %v1596 = vpop.permute.xlu0 %1595
    %v1598 = vmul.f32 %v1588, %v1596
    %1600 = vrot.lane.b32.xlu0 %v1598, 32
    %v1601 = vpop.permute.xlu0 %1600
    %v1603 = vadd.f32 %v1593, %v1601
    %v1604 = vtanh.pop %v1603
    %1606 = vrot.lane.b32.xlu0 %v1604, 64
    %v1607 = vpop.permute.xlu0 %1606
    %v1609 = vmul.f32 %v1588, %v1607
    %v1610 = vxor.u32 %v1582, 2147483648
    %v1611 = vmul.f32 %v1610, 1.442695
    %v1612 = vpow.pop %v1611
    %v1613 = vadd.f32 %v1612, 1.0
    %v1614 = vrcp.pop %v1613
    %v1615 = vmul.f32 1.0, %v1614
    %v1616 = vtanh.pop %v1582
    %v1618 = vrot.slane %v1463, 2
    %v1620 = vmul.f32 %v1615, %v1618
    %1622 = vrot.lane.b32.xlu0 %v1616, 64
    %v1623 = vpop.permute.xlu0 %1622
    %v1625 = vmul.f32 %v1615, %v1623
    %1627 = vrot.lane.b32.xlu0 %v1625, 32
    %v1628 = vpop.permute.xlu0 %1627
    %v1630 = vadd.f32 %v1620, %v1628
    %v1631 = vtanh.pop %v1630
    %1633 = vrot.lane.b32.xlu0 %v1631, 64
    %v1634 = vpop.permute.xlu0 %1633
    %v1636 = vmul.f32 %v1615, %v1634
    %1638 = vrot.lane.b32.xlu0 %v1609, 32
    %v1639 = vpop.permute.xlu0 %1638
    %1641 = vst.msk [vmem:[#allocation3 + $0x8] sm:$0xc0] %vm966, %v1639
    %1643 = vrot.lane.b32.xlu0 %v1636, 64
    %v1644 = vpop.permute.xlu0 %1643
    %1646 = vst.msk [vmem:[#allocation3] sm:$0x3] %vm972, %v1644
    %v1647 = vld [vmem:[#allocation3] sm:$0xff]
    %v1648 = vld [vmem:[#allocation3 + $0x8] sm:$0xff]
    %v1649 = vld [vmem:[#allocation10] sm:$0xff]
    %v1650 = vld [vmem:[#allocation10 + $0x8] sm:$0xff]
    %v1651 = vld [vmem:[#allocation10 + $0x10] sm:$0xff]
    %v1652 = vld [vmem:[#allocation10 + $0x18] sm:$0xff]
    %v1653 = vld [vmem:[#allocation10 + $0x20] sm:$0xff]
    %v1654 = vld [vmem:[#allocation10 + $0x28] sm:$0xff]
    %v1655 = vld [vmem:[#allocation10 + $0x30] sm:$0xff]
    %v1656 = vld [vmem:[#allocation10 + $0x38] sm:$0xff]
    %v1657 = vld [vmem:[%s8] sm:$0x1]
    %v1659 = vlaneseq
    %v1660 = vshrl.u32 %v1659, 7
    %v1661 = vsub.s32 0, %v1660
    %v1662 = vrot.slane %v1657, %v1661
    %v1665 = vsel %vm320, %v1647, 0
    %v1668 = vsel %vm320, %v1648, 0
    %1670 = vmatprep.subr.mxu0 0.0
    %1671 = vmatpush1.msra.mxu0 %v1649
    %1672 = vmatprep.subr.mxu0 0.0
    %1673 = vmatpush1.msra.mxu0 %v1650
    %1674 = vmatprep.subr.mxu0 0.0
    %1675 = vmatpush1.msra.mxu0 %v1651
    %1676 = vmatprep.subr.mxu0 0.0
    %1677 = vmatpush1.msra.mxu0 %v1652
    %1678 = vmatprep.subr.mxu0 0.0
    %1679 = vmatpush1.msra.mxu0 %v1653
    %1680 = vmatprep.subr.mxu0 0.0
    %1681 = vmatpush1.msra.mxu0 %v1654
    %1682 = vmatprep.subr.mxu0 0.0
    %1683 = vmatpush1.msra.mxu0 %v1655
    %1684 = vmatprep.subr.mxu0 0.0
    %1685 = vmatpush1.msra.mxu0 %v1656
    %1686 = vmatprep.subr.mxu0 0.0
    %1687 = vmatpush1.msra.mxu0 0.0
    %1688 = vmatprep.subr.mxu0 0.0
    %1689 = vmatpush1.msra.mxu0 0.0
    %1690 = vmatprep.subr.mxu0 0.0
    %1691 = vmatpush1.msra.mxu0 0.0
    %1692 = vmatprep.subr.mxu0 0.0
    %1693 = vmatpush1.msra.mxu0 0.0
    %1694 = vmatprep.subr.mxu0 0.0
    %1695 = vmatpush1.msra.mxu0 0.0
    %1696 = vmatprep.subr.mxu0 0.0
    %1697 = vmatpush1.msra.mxu0 0.0
    %1698 = vmatprep.subr.mxu0 0.0
    %1699 = vmatpush1.msra.mxu0 0.0
    %1700 = vmatprep.subr.mxu0 0.0
    %1701 = vmatpush1.msra.mxu0 0.0
    %1702 = vmatprep.subr.mxu0 0.0
    %1703 = vmatpush1.msra.mxu0 0.0
    %1704 = vmatprep.subr.mxu0 0.0
    %1705 = vmatpush1.msra.mxu0 0.0
    %1706 = vmatprep.subr.mxu0 0.0
    %1707 = vmatpush1.msra.mxu0 0.0
    %1708 = vmatprep.subr.mxu0 0.0
    %1709 = vmatpush1.msra.mxu0 0.0
    %1710 = vmatprep.subr.mxu0 0.0
    %1711 = vmatpush1.msra.mxu0 0.0
    %1712 = vmatprep.subr.mxu0 0.0
    %1713 = vmatpush1.msra.mxu0 0.0
    %1714 = vmatprep.subr.mxu0 0.0
    %1715 = vmatpush1.msra.mxu0 0.0
    %1716 = vmatprep.subr.mxu0 0.0
    %1717 = vmatpush1.msra.mxu0 0.0
    %1718 = vmatprep.subr.mxu0 0.0
    %1719 = vmatpush1.msra.mxu0 0.0
    %1720 = vmatprep.subr.mxu0 0.0
    %1721 = vmatpush1.msra.mxu0 0.0
    %1722 = vmatprep.subr.mxu0 0.0
    %1723 = vmatpush1.msra.mxu0 0.0
    %1724 = vmatprep.subr.mxu0 0.0
    %1725 = vmatpush1.msra.mxu0 0.0
    %1726 = vmatprep.subr.mxu0 0.0
    %1727 = vmatpush1.msra.mxu0 0.0
    %1728 = vmatprep.subr.mxu0 0.0
    %1729 = vmatpush1.msra.mxu0 0.0
    %1730 = vmatprep.subr.mxu0 0.0
    %1731 = vmatpush1.msra.mxu0 0.0
    %1732 = vmatprep.subr.mxu0 0.0
    %1733 = vmatpush1.msra.mxu0 0.0
    %1734 = vmatprep.mubr.f32.mxu0 0.0
    %1735 = vmatmul.mubr.f32.gmra.mrb[0].mxu0 %v1665
    %v1736 = vpop.f32.mrb[0].mxu0
    %v1737 = vadd.f32 %v1662, %v1736
    %v1738 = vpop.f32.mrb[0].mxu0
    %1739 = vmatprep.mubr.f32.mxu0 0.0
    %1740 = vmatmul.mubr.f32.gmra.mrb[0].mxu0 %v1668
    %v1741 = vpop.f32.mrb[0].mxu0
    %v1742 = vadd.f32 %v1662, %v1741
    %v1743 = vpop.f32.mrb[0].mxu0
    %1744 = vdwg.mxu0
    %1745 = vst [vmem:[#allocation12] sm:$0xff] %v1737
    %1746 = vst [vmem:[#allocation12 + $0x8] sm:$0xff] %v1742
    // Predicated region
    $region54: #{tpu_custom_call.1} parent=1 // pred_check
      _
    $region55: #{tpu_custom_call.1} parent=1 // pred_check_branch
      %1748 = sbr.rel (0) target = $region57
    $region56: #{tpu_custom_call.1} parent=1 // pred_region
      %s1750 = ssub.s32 256, 256
      %1751 = vsyncadd [#allocation6], %s1750
      %s1752 = sshll.u32 [#allocation12], 4
      %s1753 = int_to_ptr.vmem [resolvable:$true] %s1752
      %1758 = dma.vmem_to_hbm [thread:$0]  %s1753, 256, %s9, [#allocation6], 128, 128, 8
    $region57: #{tpu_custom_call.1} parent=1 // pred_fallthru
      _
    // Predicated region
    $region58: #{tpu_custom_call.1} parent=1 // pred_check
      _
    $region59: #{tpu_custom_call.1} parent=1 // pred_check_branch
      %1760 = sbr.rel (0) target = $region61
    $region60: #{tpu_custom_call.1} parent=1 // pred_region
      %1761 = dma.done [#allocation6], 256
    $region61: #{tpu_custom_call.1} parent=1 // pred_fallthru
      _
    %1762 = vsyncpa [#allocation5], 1
    %1763 = vsyncpa [#allocation8], 1
    %1764 = vsyncpa [#allocation11], 1
    %1765 = vsyncpa [#allocation6], 1

</llo_original>
